<compile_context>
chip_gen: v7x
topology: tpu7x:2x2x1
jax: 0.10.0
libtpu: 0.0.40
codegen_flags: <defaults>
</compile_context>

<pallas_src>
import jax
import jax.numpy as jnp
from jax.experimental import pallas as pl
from jax.experimental.pallas import tpu as pltpu

EPS = 1e-5
LANE = 128


def _round_up(n, m):
    return (n + m - 1) // m * m


def mlp_model_kernel(x_ref, w1_ref, w2_ref, w3_ref, pp_ref, o_ref):
    """Fused input-BN -> (Linear -> BN -> ReLU) x2 -> Linear head."""
    hidden = w1_ref.shape[1]
    out_pad = o_ref.shape[1]

    # Packed per-feature params: rows 0..3 = g1, be1, g2, be2 ([1,hidden]),
    # row 4 = bb3 (zero-padded to out_pad).  One lane-dense slab, one DMA.
    pp = pp_ref[...]
    g1, be1 = pp[0:1, :hidden], pp[1:2, :hidden]
    g2, be2 = pp[2:3, :hidden], pp[3:4, :hidden]
    bb3 = pp[4:5, :out_pad]

    def bn_relu(h, gamma, beta):
        # Training-mode BatchNorm1d (biased variance, single pass) folded into
        # one scale + one shift full-tile VPU op, then ReLU.  Stats in f32.
        mean = jnp.mean(h, axis=0, keepdims=True)
        msq = jnp.mean(h * h, axis=0, keepdims=True)
        var = jnp.maximum(msq - mean * mean, 0.0)
        scale = gamma * jax.lax.rsqrt(var + EPS)
        shift = beta - mean * scale
        return jnp.maximum(h * scale + shift, 0.0)

    # Input BatchNorm: mean/var normalization only.  Its affine (g0, b0) was
    # folded into W1 at prepare time; the additive parts (b0@W1, bias1) are
    # cancelled by BN1's mean subtraction.
    x = x_ref[...].astype(jnp.float32)
    mean = jnp.mean(x, axis=0, keepdims=True)
    msq = jnp.mean(x * x, axis=0, keepdims=True)
    var = jnp.maximum(msq - mean * mean, 0.0)
    scale = jax.lax.rsqrt(var + EPS)
    h = x * scale + (-mean * scale)

    # layer 1: Linear (bias dropped) -> BN -> ReLU.  bf16 operands, f32 acc.
    h = jnp.dot(h.astype(jnp.bfloat16), w1_ref[...],
                preferred_element_type=jnp.float32)
    h = bn_relu(h, g1, be1)

    # layer 2: Linear (bias dropped) -> BN -> ReLU
    h = jnp.dot(h.astype(jnp.bfloat16), w2_ref[...],
                preferred_element_type=jnp.float32)
    h = bn_relu(h, g2, be2)

    # head: lane-dense padded output (unmasked stores); wrapper slices.
    o_ref[...] = (
        jnp.dot(h.astype(jnp.bfloat16), w3_ref[...],
                preferred_element_type=jnp.float32) + bb3
    ).astype(o_ref.dtype)


def prepare_params(params, matmul_dtype=jnp.bfloat16):
    """One-time prep (hoisted out of the forward path).

    Folds the input-BN affine into W1, drops the Linear-1/2 biases (exactly
    cancelled by the following BN mean subtraction), zero-pads the head to a
    lane-dense multiple of 128 columns, packs the five tiny per-feature
    vectors into one [8, W] f32 slab, and casts matmul weights to bf16.
    """
    hidden, out_size = params["w3"].shape
    out_pad = _round_up(out_size, LANE)
    width = max(_round_up(hidden, LANE), out_pad)

    w1_eff = (params["g0"].reshape(-1, 1) * params["w1"]).astype(matmul_dtype)
    w2 = params["w2"].astype(matmul_dtype)
    w3_pad = jnp.zeros((hidden, out_pad), matmul_dtype)
    w3_pad = w3_pad.at[:, :out_size].set(params["w3"].astype(matmul_dtype))

    pp = jnp.zeros((8, width), jnp.float32)
    pp = pp.at[0, :hidden].set(params["g1"].reshape(-1))
    pp = pp.at[1, :hidden].set(params["be1"].reshape(-1))
    pp = pp.at[2, :hidden].set(params["g2"].reshape(-1))
    pp = pp.at[3, :hidden].set(params["be2"].reshape(-1))
    pp = pp.at[4, :out_size].set(params["bb3"].reshape(-1))

    prep = dict(w1=w1_eff, w2=w2, w3=w3_pad, pp=pp)
    prep = jax.block_until_ready(jax.device_put(prep))
    prep["out_size"] = out_size  # static python int, used outside jit
    return prep


@jax.jit
def _forward_padded(x, w1, w2, w3, pp):
    B = x.shape[0]
    out_pad = w3.shape[1]
    vmem = pl.BlockSpec(memory_space=pltpu.MemorySpace.VMEM)
    # Grid-less, fully VMEM-resident call (BN needs whole-batch statistics).
    return pl.pallas_call(
        mlp_model_kernel,
        out_shape=jax.ShapeDtypeStruct((B, out_pad), jnp.float32),
        in_specs=[vmem] * 5,
        out_specs=vmem,
    )(x, w1, w2, w3, pp)


def mlp_model_forward(x, prep):
    """Fused Pallas forward of MLPModel.  x: [B, input_size] float32."""
    out = _forward_padded(x, prep["w1"], prep["w2"], prep["w3"], prep["pp"])
    return out[:, : prep["out_size"]]


def init_params(key, input_size, output_size, hidden_size):
    """Deterministic synthetic parameters (PyTorch-like init, [in,out] weights)."""
    ks = jax.random.split(key, 9)

    def linear(k, n_in, n_out):
        bound = 1.0 / jnp.sqrt(n_in)
        kw, kb = jax.random.split(k)
        w = jax.random.uniform(kw, (n_in, n_out), jnp.float32, -bound, bound)
        b = jax.random.uniform(kb, (1, n_out), jnp.float32, -bound, bound)
        return w, b

    def bn_affine(kg, kb, n):
        g = 1.0 + 0.1 * jax.random.normal(kg, (1, n), jnp.float32)
        b = 0.1 * jax.random.normal(kb, (1, n), jnp.float32)
        return g, b

    w1, bb1 = linear(ks[0], input_size, hidden_size)
    w2, bb2 = linear(ks[1], hidden_size, hidden_size)
    w3, bb3 = linear(ks[2], hidden_size, output_size)
    g0, b0 = bn_affine(ks[3], ks[4], input_size)
    g1, be1 = bn_affine(ks[5], ks[6], hidden_size)
    g2, be2 = bn_affine(ks[7], ks[8], hidden_size)

    return dict(
        g0=g0, b0=b0,
        w1=w1, bb1=bb1, g1=g1, be1=be1,
        w2=w2, bb2=bb2, g2=g2, be2=be2,
        w3=w3, bb3=bb3,
    )


def _bn_train_ref(h, gamma, beta):
    mean = jnp.mean(h, axis=0, keepdims=True)
    var = jnp.mean((h - mean) * (h - mean), axis=0, keepdims=True)
    return (h - mean) * jax.lax.rsqrt(var + EPS) * gamma + beta


def reference_forward(x, p):
    """Pure-JAX f32 reference mirroring the PyTorch module exactly (with biases)."""
    h = _bn_train_ref(x, p["g0"], p["b0"])
    h = jnp.maximum(_bn_train_ref(h @ p["w1"] + p["bb1"], p["g1"], p["be1"]), 0.0)
    h = jnp.maximum(_bn_train_ref(h @ p["w2"] + p["bb2"], p["g2"], p["be2"]), 0.0)
    return h @ p["w3"] + p["bb3"]


if __name__ == "__main__":
    # Module-default hidden=128 (lane-dense); batch=256 amortizes launch/DMA
    # overhead per the perf review while remaining tiny (16 KiB of input).
    batch = 256
    input_size = 16
    hidden_size = 128
    output_size = 4

    key = jax.random.PRNGKey(0)
    kx, kp = jax.random.split(key)
    x = jax.random.normal(kx, (batch, input_size), jnp.float32)
    params = init_params(kp, input_size, output_size, hidden_size)

    # One-time parameter preparation (hoisted out of the forward path).
    prep = prepare_params(params)

    # zero_state(batch) -> (None,); forward returns (x, state)
    # TODO(synk): training-mode BatchNorm running-stat buffer updates (module
    # side effect) are not materialized; only the forward output is computed.
    state = (None,)
    out = mlp_model_forward(x, prep)
    out = jax.block_until_ready(out)
    result = (out, state)

    ref = reference_forward(x, params)
    assert out.shape == (batch, output_size)
    # bf16 matmul operands (f32 accumulation / f32 BN stats) vs the literal
    # f32 PyTorch-ordered reference: tolerance loosened per the perf review.
    assert jnp.allclose(out, ref, atol=5e-2, rtol=5e-2), "mismatch vs JAX reference"

    print("KERNEL_OK")
</pallas_src>

<mosaic_0001>
module attributes {stable_mosaic.version = 11 : i64} {
  func.func @mlp_model_kernel(%arg0: memref<256x16xf32, #tpu.memory_space<vmem>>, %arg1: memref<16x128xbf16, #tpu.memory_space<vmem>>, %arg2: memref<128x128xbf16, #tpu.memory_space<vmem>>, %arg3: memref<128x128xbf16, #tpu.memory_space<vmem>>, %arg4: memref<8x128xf32, #tpu.memory_space<vmem>>, %arg5: memref<256x128xf32, #tpu.memory_space<vmem>>) attributes {dimension_semantics = [], scalar_prefetch = 0 : i64, scratch_operands = 0 : i64, tpu.core_type = #tpu.core_type<tc>} {
    %c0 = arith.constant 0 : index
    %c0_0 = arith.constant 0 : index
    %0 = vector.load %arg4[%c0, %c0_0] : memref<8x128xf32, #tpu.memory_space<vmem>>, vector<8x128xf32>
    %1 = vector.extract_strided_slice %0 {offsets = [0, 0], sizes = [1, 128], strides = [1, 1]} : vector<8x128xf32> to vector<1x128xf32>
    %2 = vector.extract_strided_slice %0 {offsets = [1, 0], sizes = [1, 128], strides = [1, 1]} : vector<8x128xf32> to vector<1x128xf32>
    %3 = vector.extract_strided_slice %0 {offsets = [2, 0], sizes = [1, 128], strides = [1, 1]} : vector<8x128xf32> to vector<1x128xf32>
    %4 = vector.extract_strided_slice %0 {offsets = [3, 0], sizes = [1, 128], strides = [1, 1]} : vector<8x128xf32> to vector<1x128xf32>
    %5 = vector.extract_strided_slice %0 {offsets = [4, 0], sizes = [1, 128], strides = [1, 1]} : vector<8x128xf32> to vector<1x128xf32>
    %c0_1 = arith.constant 0 : index
    %c0_2 = arith.constant 0 : index
    %6 = vector.load %arg0[%c0_1, %c0_2] : memref<256x16xf32, #tpu.memory_space<vmem>>, vector<256x16xf32>
    %cst = arith.constant dense<0.000000e+00> : vector<16xf32>
    %7 = vector.multi_reduction <add>, %6, %cst [0] : vector<256x16xf32> to vector<16xf32>
    %8 = vector.shape_cast %7 : vector<16xf32> to vector<1x16xf32>
    %cst_3 = arith.constant 2.560000e+02 : f32
    %9 = vector.broadcast %cst_3 : f32 to vector<1x16xf32>
    %10 = arith.divf %8, %9 : vector<1x16xf32>
    %11 = arith.mulf %6, %6 : vector<256x16xf32>
    %cst_4 = arith.constant dense<0.000000e+00> : vector<16xf32>
    %12 = vector.multi_reduction <add>, %11, %cst_4 [0] : vector<256x16xf32> to vector<16xf32>
    %13 = vector.shape_cast %12 : vector<16xf32> to vector<1x16xf32>
    %cst_5 = arith.constant 2.560000e+02 : f32
    %14 = vector.broadcast %cst_5 : f32 to vector<1x16xf32>
    %15 = arith.divf %13, %14 : vector<1x16xf32>
    %16 = arith.mulf %10, %10 : vector<1x16xf32>
    %17 = arith.subf %15, %16 : vector<1x16xf32>
    %cst_6 = arith.constant 0.000000e+00 : f32
    %18 = vector.broadcast %cst_6 : f32 to vector<1x16xf32>
    %19 = arith.maximumf %17, %18 : vector<1x16xf32>
    %cst_7 = arith.constant 9.99999974E-6 : f32
    %20 = vector.broadcast %cst_7 : f32 to vector<1x16xf32>
    %21 = arith.addf %19, %20 : vector<1x16xf32>
    %22 = math.rsqrt %21 : vector<1x16xf32>
    %23 = vector.broadcast %22 : vector<1x16xf32> to vector<256x16xf32>
    %24 = arith.mulf %6, %23 : vector<256x16xf32>
    %cst_8 = arith.constant 0.000000e+00 : f32
    %25 = vector.broadcast %cst_8 : f32 to vector<1x16xf32>
    %26 = arith.subf %25, %10 : vector<1x16xf32>
    %27 = arith.mulf %26, %22 : vector<1x16xf32>
    %28 = vector.broadcast %27 : vector<1x16xf32> to vector<256x16xf32>
    %29 = arith.addf %24, %28 : vector<256x16xf32>
    %30 = arith.truncf %29 : vector<256x16xf32> to vector<256x16xbf16>
    %c0_9 = arith.constant 0 : index
    %c0_10 = arith.constant 0 : index
    %31 = vector.load %arg1[%c0_9, %c0_10] : memref<16x128xbf16, #tpu.memory_space<vmem>>, vector<16x128xbf16>
    %cst_11 = arith.constant dense<0.000000e+00> : vector<256x128xf32>
    %32 = tpu.matmul %30, %31, %cst_11 {dimension_numbers = #tpu.dot_dimension_numbers<[1], [0], [0], [1], [0, 0, 1, 1], [], []>} : vector<256x16xbf16>, vector<16x128xbf16>, vector<256x128xf32> -> vector<256x128xf32>
    %cst_12 = arith.constant dense<0.000000e+00> : vector<128xf32>
    %33 = vector.multi_reduction <add>, %32, %cst_12 [0] : vector<256x128xf32> to vector<128xf32>
    %34 = vector.shape_cast %33 : vector<128xf32> to vector<1x128xf32>
    %cst_13 = arith.constant 2.560000e+02 : f32
    %35 = vector.broadcast %cst_13 : f32 to vector<1x128xf32>
    %36 = arith.divf %34, %35 : vector<1x128xf32>
    %37 = arith.mulf %32, %32 : vector<256x128xf32>
    %cst_14 = arith.constant dense<0.000000e+00> : vector<128xf32>
    %38 = vector.multi_reduction <add>, %37, %cst_14 [0] : vector<256x128xf32> to vector<128xf32>
    %39 = vector.shape_cast %38 : vector<128xf32> to vector<1x128xf32>
    %cst_15 = arith.constant 2.560000e+02 : f32
    %40 = vector.broadcast %cst_15 : f32 to vector<1x128xf32>
    %41 = arith.divf %39, %40 : vector<1x128xf32>
    %42 = arith.mulf %36, %36 : vector<1x128xf32>
    %43 = arith.subf %41, %42 : vector<1x128xf32>
    %cst_16 = arith.constant 0.000000e+00 : f32
    %44 = vector.broadcast %cst_16 : f32 to vector<1x128xf32>
    %45 = arith.maximumf %43, %44 : vector<1x128xf32>
    %cst_17 = arith.constant 9.99999974E-6 : f32
    %46 = vector.broadcast %cst_17 : f32 to vector<1x128xf32>
    %47 = arith.addf %45, %46 : vector<1x128xf32>
    %48 = math.rsqrt %47 : vector<1x128xf32>
    %49 = arith.mulf %1, %48 : vector<1x128xf32>
    %50 = arith.mulf %36, %49 : vector<1x128xf32>
    %51 = arith.subf %2, %50 : vector<1x128xf32>
    %52 = vector.broadcast %49 : vector<1x128xf32> to vector<256x128xf32>
    %53 = arith.mulf %32, %52 : vector<256x128xf32>
    %54 = vector.broadcast %51 : vector<1x128xf32> to vector<256x128xf32>
    %55 = arith.addf %53, %54 : vector<256x128xf32>
    %cst_18 = arith.constant 0.000000e+00 : f32
    %56 = vector.broadcast %cst_18 : f32 to vector<256x128xf32>
    %57 = arith.maximumf %55, %56 : vector<256x128xf32>
    %58 = arith.truncf %57 : vector<256x128xf32> to vector<256x128xbf16>
    %c0_19 = arith.constant 0 : index
    %c0_20 = arith.constant 0 : index
    %59 = vector.load %arg2[%c0_19, %c0_20] : memref<128x128xbf16, #tpu.memory_space<vmem>>, vector<128x128xbf16>
    %cst_21 = arith.constant dense<0.000000e+00> : vector<256x128xf32>
    %60 = tpu.matmul %58, %59, %cst_21 {dimension_numbers = #tpu.dot_dimension_numbers<[1], [0], [0], [1], [0, 0, 1, 1], [], []>} : vector<256x128xbf16>, vector<128x128xbf16>, vector<256x128xf32> -> vector<256x128xf32>
    %cst_22 = arith.constant dense<0.000000e+00> : vector<128xf32>
    %61 = vector.multi_reduction <add>, %60, %cst_22 [0] : vector<256x128xf32> to vector<128xf32>
    %62 = vector.shape_cast %61 : vector<128xf32> to vector<1x128xf32>
    %cst_23 = arith.constant 2.560000e+02 : f32
    %63 = vector.broadcast %cst_23 : f32 to vector<1x128xf32>
    %64 = arith.divf %62, %63 : vector<1x128xf32>
    %65 = arith.mulf %60, %60 : vector<256x128xf32>
    %cst_24 = arith.constant dense<0.000000e+00> : vector<128xf32>
    %66 = vector.multi_reduction <add>, %65, %cst_24 [0] : vector<256x128xf32> to vector<128xf32>
    %67 = vector.shape_cast %66 : vector<128xf32> to vector<1x128xf32>
    %cst_25 = arith.constant 2.560000e+02 : f32
    %68 = vector.broadcast %cst_25 : f32 to vector<1x128xf32>
    %69 = arith.divf %67, %68 : vector<1x128xf32>
    %70 = arith.mulf %64, %64 : vector<1x128xf32>
    %71 = arith.subf %69, %70 : vector<1x128xf32>
    %cst_26 = arith.constant 0.000000e+00 : f32
    %72 = vector.broadcast %cst_26 : f32 to vector<1x128xf32>
    %73 = arith.maximumf %71, %72 : vector<1x128xf32>
    %cst_27 = arith.constant 9.99999974E-6 : f32
    %74 = vector.broadcast %cst_27 : f32 to vector<1x128xf32>
    %75 = arith.addf %73, %74 : vector<1x128xf32>
    %76 = math.rsqrt %75 : vector<1x128xf32>
    %77 = arith.mulf %3, %76 : vector<1x128xf32>
    %78 = arith.mulf %64, %77 : vector<1x128xf32>
    %79 = arith.subf %4, %78 : vector<1x128xf32>
    %80 = vector.broadcast %77 : vector<1x128xf32> to vector<256x128xf32>
    %81 = arith.mulf %60, %80 : vector<256x128xf32>
    %82 = vector.broadcast %79 : vector<1x128xf32> to vector<256x128xf32>
    %83 = arith.addf %81, %82 : vector<256x128xf32>
    %cst_28 = arith.constant 0.000000e+00 : f32
    %84 = vector.broadcast %cst_28 : f32 to vector<256x128xf32>
    %85 = arith.maximumf %83, %84 : vector<256x128xf32>
    %86 = arith.truncf %85 : vector<256x128xf32> to vector<256x128xbf16>
    %c0_29 = arith.constant 0 : index
    %c0_30 = arith.constant 0 : index
    %87 = vector.load %arg3[%c0_29, %c0_30] : memref<128x128xbf16, #tpu.memory_space<vmem>>, vector<128x128xbf16>
    %cst_31 = arith.constant dense<0.000000e+00> : vector<256x128xf32>
    %88 = tpu.matmul %86, %87, %cst_31 {dimension_numbers = #tpu.dot_dimension_numbers<[1], [0], [0], [1], [0, 0, 1, 1], [], []>} : vector<256x128xbf16>, vector<128x128xbf16>, vector<256x128xf32> -> vector<256x128xf32>
    %89 = vector.broadcast %5 : vector<1x128xf32> to vector<256x128xf32>
    %90 = arith.addf %88, %89 : vector<256x128xf32>
    %c0_32 = arith.constant 0 : index
    %c0_33 = arith.constant 0 : index
    %91 = vector.load %arg5[%c0_32, %c0_33] : memref<256x128xf32, #tpu.memory_space<vmem>>, vector<256x128xf32>
    tpu.vector_store %arg5[%c0_32, %c0_33], %90 {strides = array<i32>} : memref<256x128xf32, #tpu.memory_space<vmem>>, vector<256x128xf32>,
    return
  }
}

</mosaic_0001>

<llo_original>
// kernel: _forward_padded.1
$region0: #{_forward_padded.1}
  #allocation0 [shape = 'u32[]', space=smem, size = 0x4, offset = 0x4, fixed_abs, tag = 'smem constant byte address 0x4 - core index']
  #allocation1 [shape = 'u32[144,128]{1,0:T(1,128)}', space=vmem, size = 0x12000, scoped, tag = 'internal scratch']
  %s0 = inlined_call_operand.vmem [shape: f32[256,16], index: 0, kind: input, shape index: {}]
  %s1 = inlined_call_operand.vmem [shape: bf16[16,128], index: 1, kind: input, shape index: {}]
  %s2 = inlined_call_operand.vmem [shape: bf16[128,128], index: 2, kind: input, shape index: {}]
  %s3 = inlined_call_operand.vmem [shape: bf16[128,128], index: 3, kind: input, shape index: {}]
  %s4 = inlined_call_operand.vmem [shape: f32[8,128], index: 4, kind: input, shape index: {}]
  %s5 = inlined_call_operand.hbm [shape: f32[256,128], index: 5, kind: output, shape index: {}]
  %s6 = sld [smem:[#allocation0]]
  $region30: #{_forward_padded.1} parent=0
    _
  %s8 = ssub.s32 1, %s6
  %s9 = scalar_select 0, %s8, %s6
  $region1: #{_forward_padded.1} parent=0
    #allocation2 [shape = 'u8[131072]{0}', space=vmem, size = 0x20000, scoped, tag = 'output window, operand 0, single buffered']
    #allocation3 [shape = 's32[1]{0}', space=sflag, size = 0x4, scoped, tag = 'scoped memory for _forward_padded.1']
    %10 = vsyncpa [#allocation3], 0
    // Predicated region
    $region2: #{_forward_padded.1} parent=1 // pred_check
      _
    $region3: #{_forward_padded.1} parent=1 // pred_check_branch
      %12 = sbr.rel (0) target = $region5
    $region4: #{_forward_padded.1} parent=1 // pred_region
      _
    $region5: #{_forward_padded.1} parent=1 // pred_fallthru
      _
    // Predicated region
    $region6: #{_forward_padded.1} parent=1 // pred_check
      _
    $region7: #{_forward_padded.1} parent=1 // pred_check_branch
      %14 = sbr.rel (0) target = $region9
    $region8: #{_forward_padded.1} parent=1 // pred_region
      _
    $region9: #{_forward_padded.1} parent=1 // pred_fallthru
      _
    // Predicated region
    $region10: #{_forward_padded.1} parent=1 // pred_check
      _
    $region11: #{_forward_padded.1} parent=1 // pred_check_branch
      %16 = sbr.rel (0) target = $region13
    $region12: #{_forward_padded.1} parent=1 // pred_region
      _
    $region13: #{_forward_padded.1} parent=1 // pred_fallthru
      _
    // Predicated region
    $region14: #{_forward_padded.1} parent=1 // pred_check
      _
    $region15: #{_forward_padded.1} parent=1 // pred_check_branch
      %18 = sbr.rel (0) target = $region17
    $region16: #{_forward_padded.1} parent=1 // pred_region
      _
    $region17: #{_forward_padded.1} parent=1 // pred_fallthru
      _
    // Predicated region
    $region18: #{_forward_padded.1} parent=1 // pred_check
      _
    $region19: #{_forward_padded.1} parent=1 // pred_check_branch
      %20 = sbr.rel (0) target = $region21
    $region20: #{_forward_padded.1} parent=1 // pred_region
      _
    $region21: #{_forward_padded.1} parent=1 // pred_fallthru
      _
    %v22 = vld [vmem:[%s4] sm:$0xff]
    %v23 = vld [vmem:[%s0] sm:$0xff]
    %v24 = vld [vmem:[%s0 + $0x8] sm:$0xff]
    %v25 = vld [vmem:[%s0 + $0x10] sm:$0xff]
    %v26 = vld [vmem:[%s0 + $0x18] sm:$0xff]
    %v27 = vld [vmem:[%s0 + $0x20] sm:$0xff]
    %v28 = vld [vmem:[%s0 + $0x28] sm:$0xff]
    %v29 = vld [vmem:[%s0 + $0x30] sm:$0xff]
    %v30 = vld [vmem:[%s0 + $0x38] sm:$0xff]
    %v31 = vld [vmem:[%s0 + $0x40] sm:$0xff]
    %v32 = vld [vmem:[%s0 + $0x48] sm:$0xff]
    %v33 = vld [vmem:[%s0 + $0x50] sm:$0xff]
    %v34 = vld [vmem:[%s0 + $0x58] sm:$0xff]
    %v35 = vld [vmem:[%s0 + $0x60] sm:$0xff]
    %v36 = vld [vmem:[%s0 + $0x68] sm:$0xff]
    %v37 = vld [vmem:[%s0 + $0x70] sm:$0xff]
    %v38 = vld [vmem:[%s0 + $0x78] sm:$0xff]
    %v39 = vld [vmem:[%s0 + $0x80] sm:$0xff]
    %v40 = vld [vmem:[%s0 + $0x88] sm:$0xff]
    %v41 = vld [vmem:[%s0 + $0x90] sm:$0xff]
    %v42 = vld [vmem:[%s0 + $0x98] sm:$0xff]
    %v43 = vld [vmem:[%s0 + $0xa0] sm:$0xff]
    %v44 = vld [vmem:[%s0 + $0xa8] sm:$0xff]
    %v45 = vld [vmem:[%s0 + $0xb0] sm:$0xff]
    %v46 = vld [vmem:[%s0 + $0xb8] sm:$0xff]
    %v47 = vld [vmem:[%s0 + $0xc0] sm:$0xff]
    %v48 = vld [vmem:[%s0 + $0xc8] sm:$0xff]
    %v49 = vld [vmem:[%s0 + $0xd0] sm:$0xff]
    %v50 = vld [vmem:[%s0 + $0xd8] sm:$0xff]
    %v51 = vld [vmem:[%s0 + $0xe0] sm:$0xff]
    %v52 = vld [vmem:[%s0 + $0xe8] sm:$0xff]
    %v53 = vld [vmem:[%s0 + $0xf0] sm:$0xff]
    %v54 = vld [vmem:[%s0 + $0xf8] sm:$0xff]
    %vm55 = vcmask 130048
    %v56 = vsel %vm55, %v23, 0.0
    %v57 = vsel %vm55, %v24, 0.0
    %v58 = vadd.f32 %v56, %v57
    %v59 = vsel %vm55, %v25, 0.0
    %v60 = vadd.f32 %v58, %v59
    %v61 = vsel %vm55, %v26, 0.0
    %v62 = vadd.f32 %v60, %v61
    %v63 = vsel %vm55, %v27, 0.0
    %v64 = vadd.f32 %v62, %v63
    %v65 = vsel %vm55, %v28, 0.0
    %v66 = vadd.f32 %v64, %v65
    %v67 = vsel %vm55, %v29, 0.0
    %v68 = vadd.f32 %v66, %v67
    %v69 = vsel %vm55, %v30, 0.0
    %v70 = vadd.f32 %v68, %v69
    %v71 = vsel %vm55, %v31, 0.0
    %v72 = vadd.f32 %v70, %v71
    %v73 = vsel %vm55, %v32, 0.0
    %v74 = vadd.f32 %v72, %v73
    %v75 = vsel %vm55, %v33, 0.0
    %v76 = vadd.f32 %v74, %v75
    %v77 = vsel %vm55, %v34, 0.0
    %v78 = vadd.f32 %v76, %v77
    %v79 = vsel %vm55, %v35, 0.0
    %v80 = vadd.f32 %v78, %v79
    %v81 = vsel %vm55, %v36, 0.0
    %v82 = vadd.f32 %v80, %v81
    %v83 = vsel %vm55, %v37, 0.0
    %v84 = vadd.f32 %v82, %v83
    %v85 = vsel %vm55, %v38, 0.0
    %v86 = vadd.f32 %v84, %v85
    %v87 = vsel %vm55, %v39, 0.0
    %v88 = vadd.f32 %v86, %v87
    %v89 = vsel %vm55, %v40, 0.0
    %v90 = vadd.f32 %v88, %v89
    %v91 = vsel %vm55, %v41, 0.0
    %v92 = vadd.f32 %v90, %v91
    %v93 = vsel %vm55, %v42, 0.0
    %v94 = vadd.f32 %v92, %v93
    %v95 = vsel %vm55, %v43, 0.0
    %v96 = vadd.f32 %v94, %v95
    %v97 = vsel %vm55, %v44, 0.0
    %v98 = vadd.f32 %v96, %v97
    %v99 = vsel %vm55, %v45, 0.0
    %v100 = vadd.f32 %v98, %v99
    %v101 = vsel %vm55, %v46, 0.0
    %v102 = vadd.f32 %v100, %v101
    %v103 = vsel %vm55, %v47, 0.0
    %v104 = vadd.f32 %v102, %v103
    %v105 = vsel %vm55, %v48, 0.0
    %v106 = vadd.f32 %v104, %v105
    %v107 = vsel %vm55, %v49, 0.0
    %v108 = vadd.f32 %v106, %v107
    %v109 = vsel %vm55, %v50, 0.0
    %v110 = vadd.f32 %v108, %v109
    %v111 = vsel %vm55, %v51, 0.0
    %v112 = vadd.f32 %v110, %v111
    %v113 = vsel %vm55, %v52, 0.0
    %v114 = vadd.f32 %v112, %v113
    %v115 = vsel %vm55, %v53, 0.0
    %v116 = vadd.f32 %v114, %v115
    %v117 = vsel %vm55, %v54, 0.0
    %v118 = vadd.f32 %v116, %v117
    %v119 = vrot.slane %v118, 4
    %v120 = vadd.f32 %v118, %v119
    %v121 = vrot.slane %v120, 2
    %v122 = vadd.f32 %v120, %v121
    %v123 = vrot.slane %v122, 1
    %v124 = vadd.f32 %v122, %v123
    %v125 = vrcp.pop 256.0
    %v126 = vmul.f32 %v124, %v125
    %v127 = vmul.f32 %v23, %v23
    %v128 = vmul.f32 %v24, %v24
    %v129 = vmul.f32 %v25, %v25
    %v130 = vmul.f32 %v26, %v26
    %v131 = vmul.f32 %v27, %v27
    %v132 = vmul.f32 %v28, %v28
    %v133 = vmul.f32 %v29, %v29
    %v134 = vmul.f32 %v30, %v30
    %v135 = vmul.f32 %v31, %v31
    %v136 = vmul.f32 %v32, %v32
    %v137 = vmul.f32 %v33, %v33
    %v138 = vmul.f32 %v34, %v34
    %v139 = vmul.f32 %v35, %v35
    %v140 = vmul.f32 %v36, %v36
    %v141 = vmul.f32 %v37, %v37
    %v142 = vmul.f32 %v38, %v38
    %v143 = vmul.f32 %v39, %v39
    %v144 = vmul.f32 %v40, %v40
    %v145 = vmul.f32 %v41, %v41
    %v146 = vmul.f32 %v42, %v42
    %v147 = vmul.f32 %v43, %v43
    %v148 = vmul.f32 %v44, %v44
    %v149 = vmul.f32 %v45, %v45
    %v150 = vmul.f32 %v46, %v46
    %v151 = vmul.f32 %v47, %v47
    %v152 = vmul.f32 %v48, %v48
    %v153 = vmul.f32 %v49, %v49
    %v154 = vmul.f32 %v50, %v50
    %v155 = vmul.f32 %v51, %v51
    %v156 = vmul.f32 %v52, %v52
    %v157 = vmul.f32 %v53, %v53
    %v158 = vmul.f32 %v54, %v54
    %v159 = vsel %vm55, %v127, 0.0
    %v160 = vsel %vm55, %v128, 0.0
    %v161 = vadd.f32 %v159, %v160
    %v162 = vsel %vm55, %v129, 0.0
    %v163 = vadd.f32 %v161, %v162
    %v164 = vsel %vm55, %v130, 0.0
    %v165 = vadd.f32 %v163, %v164
    %v166 = vsel %vm55, %v131, 0.0
    %v167 = vadd.f32 %v165, %v166
    %v168 = vsel %vm55, %v132, 0.0
    %v169 = vadd.f32 %v167, %v168
    %v170 = vsel %vm55, %v133, 0.0
    %v171 = vadd.f32 %v169, %v170
    %v172 = vsel %vm55, %v134, 0.0
    %v173 = vadd.f32 %v171, %v172
    %v174 = vsel %vm55, %v135, 0.0
    %v175 = vadd.f32 %v173, %v174
    %v176 = vsel %vm55, %v136, 0.0
    %v177 = vadd.f32 %v175, %v176
    %v178 = vsel %vm55, %v137, 0.0
    %v179 = vadd.f32 %v177, %v178
    %v180 = vsel %vm55, %v138, 0.0
    %v181 = vadd.f32 %v179, %v180
    %v182 = vsel %vm55, %v139, 0.0
    %v183 = vadd.f32 %v181, %v182
    %v184 = vsel %vm55, %v140, 0.0
    %v185 = vadd.f32 %v183, %v184
    %v186 = vsel %vm55, %v141, 0.0
    %v187 = vadd.f32 %v185, %v186
    %v188 = vsel %vm55, %v142, 0.0
    %v189 = vadd.f32 %v187, %v188
    %v190 = vsel %vm55, %v143, 0.0
    %v191 = vadd.f32 %v189, %v190
    %v192 = vsel %vm55, %v144, 0.0
    %v193 = vadd.f32 %v191, %v192
    %v194 = vsel %vm55, %v145, 0.0
    %v195 = vadd.f32 %v193, %v194
    %v196 = vsel %vm55, %v146, 0.0
    %v197 = vadd.f32 %v195, %v196
    %v198 = vsel %vm55, %v147, 0.0
    %v199 = vadd.f32 %v197, %v198
    %v200 = vsel %vm55, %v148, 0.0
    %v201 = vadd.f32 %v199, %v200
    %v202 = vsel %vm55, %v149, 0.0
    %v203 = vadd.f32 %v201, %v202
    %v204 = vsel %vm55, %v150, 0.0
    %v205 = vadd.f32 %v203, %v204
    %v206 = vsel %vm55, %v151, 0.0
    %v207 = vadd.f32 %v205, %v206
    %v208 = vsel %vm55, %v152, 0.0
    %v209 = vadd.f32 %v207, %v208
    %v210 = vsel %vm55, %v153, 0.0
    %v211 = vadd.f32 %v209, %v210
    %v212 = vsel %vm55, %v154, 0.0
    %v213 = vadd.f32 %v211, %v212
    %v214 = vsel %vm55, %v155, 0.0
    %v215 = vadd.f32 %v213, %v214
    %v216 = vsel %vm55, %v156, 0.0
    %v217 = vadd.f32 %v215, %v216
    %v218 = vsel %vm55, %v157, 0.0
    %v219 = vadd.f32 %v217, %v218
    %v220 = vsel %vm55, %v158, 0.0
    %v221 = vadd.f32 %v219, %v220
    %v222 = vrot.slane %v221, 4
    %v223 = vadd.f32 %v221, %v222
    %v224 = vrot.slane %v223, 2
    %v225 = vadd.f32 %v223, %v224
    %v226 = vrot.slane %v225, 1
    %v227 = vadd.f32 %v225, %v226
    %v228 = vmul.f32 %v227, %v125
    %v229 = vmul.f32 %v126, %v126
    %v230 = vsub.f32 %v228, %v229
    %v231 = vmax.f32 %v230, 0.0
    %v232 = vadd.f32 %v231, 1e-05
    %v233 = vrsqrt.pop %v232
    %v234 = vmul.f32 %v23, %v233
    %v235 = vmul.f32 %v24, %v233
    %v236 = vmul.f32 %v25, %v233
    %v237 = vmul.f32 %v26, %v233
    %v238 = vmul.f32 %v27, %v233
    %v239 = vmul.f32 %v28, %v233
    %v240 = vmul.f32 %v29, %v233
    %v241 = vmul.f32 %v30, %v233
    %v242 = vmul.f32 %v31, %v233
    %v243 = vmul.f32 %v32, %v233
    %v244 = vmul.f32 %v33, %v233
    %v245 = vmul.f32 %v34, %v233
    %v246 = vmul.f32 %v35, %v233
    %v247 = vmul.f32 %v36, %v233
    %v248 = vmul.f32 %v37, %v233
    %v249 = vmul.f32 %v38, %v233
    %v250 = vmul.f32 %v39, %v233
    %v251 = vmul.f32 %v40, %v233
    %v252 = vmul.f32 %v41, %v233
    %v253 = vmul.f32 %v42, %v233
    %v254 = vmul.f32 %v43, %v233
    %v255 = vmul.f32 %v44, %v233
    %v256 = vmul.f32 %v45, %v233
    %v257 = vmul.f32 %v46, %v233
    %v258 = vmul.f32 %v47, %v233
    %v259 = vmul.f32 %v48, %v233
    %v260 = vmul.f32 %v49, %v233
    %v261 = vmul.f32 %v50, %v233
    %v262 = vmul.f32 %v51, %v233
    %v263 = vmul.f32 %v52, %v233
    %v264 = vmul.f32 %v53, %v233
    %v265 = vmul.f32 %v54, %v233
    %v266 = vsub.f32 0.0, %v126
    %v267 = vmul.f32 %v266, %v233
    %v268 = vadd.f32 %v234, %v267
    %v269 = vadd.f32 %v235, %v267
    %v270 = vadd.f32 %v236, %v267
    %v271 = vadd.f32 %v237, %v267
    %v272 = vadd.f32 %v238, %v267
    %v273 = vadd.f32 %v239, %v267
    %v274 = vadd.f32 %v240, %v267
    %v275 = vadd.f32 %v241, %v267
    %v276 = vadd.f32 %v242, %v267
    %v277 = vadd.f32 %v243, %v267
    %v278 = vadd.f32 %v244, %v267
    %v279 = vadd.f32 %v245, %v267
    %v280 = vadd.f32 %v246, %v267
    %v281 = vadd.f32 %v247, %v267
    %v282 = vadd.f32 %v248, %v267
    %v283 = vadd.f32 %v249, %v267
    %v284 = vadd.f32 %v250, %v267
    %v285 = vadd.f32 %v251, %v267
    %v286 = vadd.f32 %v252, %v267
    %v287 = vadd.f32 %v253, %v267
    %v288 = vadd.f32 %v254, %v267
    %v289 = vadd.f32 %v255, %v267
    %v290 = vadd.f32 %v256, %v267
    %v291 = vadd.f32 %v257, %v267
    %v292 = vadd.f32 %v258, %v267
    %v293 = vadd.f32 %v259, %v267
    %v294 = vadd.f32 %v260, %v267
    %v295 = vadd.f32 %v261, %v267
    %v296 = vadd.f32 %v262, %v267
    %v297 = vadd.f32 %v263, %v267
    %v298 = vadd.f32 %v264, %v267
    %v299 = vadd.f32 %v265, %v267
    %v300 = vpack.c.bf16 %v269, %v268
    %v301 = vpack.c.bf16 %v271, %v270
    %v302 = vpack.c.bf16 %v273, %v272
    %v303 = vpack.c.bf16 %v275, %v274
    %v304 = vpack.c.bf16 %v277, %v276
    %v305 = vpack.c.bf16 %v279, %v278
    %v306 = vpack.c.bf16 %v281, %v280
    %v307 = vpack.c.bf16 %v283, %v282
    %v308 = vpack.c.bf16 %v285, %v284
    %v309 = vpack.c.bf16 %v287, %v286
    %v310 = vpack.c.bf16 %v289, %v288
    %v311 = vpack.c.bf16 %v291, %v290
    %v312 = vpack.c.bf16 %v293, %v292
    %v313 = vpack.c.bf16 %v295, %v294
    %v314 = vpack.c.bf16 %v297, %v296
    %v315 = vpack.c.bf16 %v299, %v298
    %v316 = vld [vmem:[%s1] sm:$0xf]
    %v317 = vld [vmem:[%s1 + $0x4] sm:$0xf]
    %v320 = vunpack.c.l.b16 %v316
    %v321 = vunpack.c.l.b16 %v317
    %v322 = vpack.c.b16 %v321, %v320
    %v325 = vsel %vm55, %v300, 0
    %v328 = vsel %vm55, %v301, 0
    %v331 = vsel %vm55, %v302, 0
    %v334 = vsel %vm55, %v303, 0
    %v337 = vsel %vm55, %v304, 0
    %v340 = vsel %vm55, %v305, 0
    %v343 = vsel %vm55, %v306, 0
    %v346 = vsel %vm55, %v307, 0
    %v349 = vsel %vm55, %v308, 0
    %v352 = vsel %vm55, %v309, 0
    %v355 = vsel %vm55, %v310, 0
    %v358 = vsel %vm55, %v311, 0
    %v361 = vsel %vm55, %v312, 0
    %v364 = vsel %vm55, %v313, 0
    %v367 = vsel %vm55, %v314, 0
    %v370 = vsel %vm55, %v315, 0
    %372 = vmatprep.subr.bf16.mxu0 0
    %373 = vmatpush1.bf16.msra.mxu0 %v322
    %374 = vmatprep.subr.bf16.mxu0 0
    %375 = vmatpush1.bf16.msra.mxu0 0
    %376 = vmatprep.subr.bf16.mxu0 0
    %377 = vmatpush1.bf16.msra.mxu0 0
    %378 = vmatprep.subr.bf16.mxu0 0
    %379 = vmatpush1.bf16.msra.mxu0 0
    %380 = vmatprep.subr.bf16.mxu0 0
    %381 = vmatpush1.bf16.msra.mxu0 0
    %382 = vmatprep.subr.bf16.mxu0 0
    %383 = vmatpush1.bf16.msra.mxu0 0
    %384 = vmatprep.subr.bf16.mxu0 0
    %385 = vmatpush1.bf16.msra.mxu0 0
    %386 = vmatprep.subr.bf16.mxu0 0
    %387 = vmatpush1.bf16.msra.mxu0 0
    %388 = vmatprep.subr.bf16.mxu0 0
    %389 = vmatpush1.bf16.msra.mxu0 0
    %390 = vmatprep.subr.bf16.mxu0 0
    %391 = vmatpush1.bf16.msra.mxu0 0
    %392 = vmatprep.subr.bf16.mxu0 0
    %393 = vmatpush1.bf16.msra.mxu0 0
    %394 = vmatprep.subr.bf16.mxu0 0
    %395 = vmatpush1.bf16.msra.mxu0 0
    %396 = vmatprep.subr.bf16.mxu0 0
    %397 = vmatpush1.bf16.msra.mxu0 0
    %398 = vmatprep.subr.bf16.mxu0 0
    %399 = vmatpush1.bf16.msra.mxu0 0
    %400 = vmatprep.subr.bf16.mxu0 0
    %401 = vmatpush1.bf16.msra.mxu0 0
    %402 = vmatprep.subr.bf16.mxu0 0
    %403 = vmatpush1.bf16.msra.mxu0 0
    %404 = vmatprep.mubr.bf16.mxu0 0
    %405 = vmatmul.mubr.bf16.gmra.mrb[0].mxu0 %v325
    %v406 = vpop.f32.mrb[0].mxu0
    %v407 = vadd.f32 0.0, %v406
    %v408 = vpop.f32.mrb[0].mxu0
    %v409 = vpop.f32.mrb[0].mxu0
    %v410 = vadd.f32 0.0, %v409
    %v411 = vpop.f32.mrb[0].mxu0
    %412 = vmatprep.mubr.bf16.mxu0 0
    %413 = vmatmul.mubr.bf16.gmra.mrb[0].mxu0 %v328
    %v414 = vpop.f32.mrb[0].mxu0
    %v415 = vadd.f32 0.0, %v414
    %v416 = vpop.f32.mrb[0].mxu0
    %v417 = vpop.f32.mrb[0].mxu0
    %v418 = vadd.f32 0.0, %v417
    %v419 = vpop.f32.mrb[0].mxu0
    %420 = vmatprep.mubr.bf16.mxu0 0
    %421 = vmatmul.mubr.bf16.gmra.mrb[0].mxu0 %v331
    %v422 = vpop.f32.mrb[0].mxu0
    %v423 = vadd.f32 0.0, %v422
    %v424 = vpop.f32.mrb[0].mxu0
    %v425 = vpop.f32.mrb[0].mxu0
    %v426 = vadd.f32 0.0, %v425
    %v427 = vpop.f32.mrb[0].mxu0
    %428 = vmatprep.mubr.bf16.mxu0 0
    %429 = vmatmul.mubr.bf16.gmra.mrb[0].mxu0 %v334
    %v430 = vpop.f32.mrb[0].mxu0
    %v431 = vadd.f32 0.0, %v430
    %v432 = vpop.f32.mrb[0].mxu0
    %v433 = vpop.f32.mrb[0].mxu0
    %v434 = vadd.f32 0.0, %v433
    %v435 = vpop.f32.mrb[0].mxu0
    %436 = vmatprep.mubr.bf16.mxu0 0
    %437 = vmatmul.mubr.bf16.gmra.mrb[0].mxu0 %v337
    %v438 = vpop.f32.mrb[0].mxu0
    %v439 = vadd.f32 0.0, %v438
    %v440 = vpop.f32.mrb[0].mxu0
    %v441 = vpop.f32.mrb[0].mxu0
    %v442 = vadd.f32 0.0, %v441
    %v443 = vpop.f32.mrb[0].mxu0
    %444 = vmatprep.mubr.bf16.mxu0 0
    %445 = vmatmul.mubr.bf16.gmra.mrb[0].mxu0 %v340
    %v446 = vpop.f32.mrb[0].mxu0
    %v447 = vadd.f32 0.0, %v446
    %v448 = vpop.f32.mrb[0].mxu0
    %v449 = vpop.f32.mrb[0].mxu0
    %v450 = vadd.f32 0.0, %v449
    %v451 = vpop.f32.mrb[0].mxu0
    %452 = vmatprep.mubr.bf16.mxu0 0
    %453 = vmatmul.mubr.bf16.gmra.mrb[0].mxu0 %v343
    %v454 = vpop.f32.mrb[0].mxu0
    %v455 = vadd.f32 0.0, %v454
    %v456 = vpop.f32.mrb[0].mxu0
    %v457 = vpop.f32.mrb[0].mxu0
    %v458 = vadd.f32 0.0, %v457
    %v459 = vpop.f32.mrb[0].mxu0
    %460 = vmatprep.mubr.bf16.mxu0 0
    %461 = vmatmul.mubr.bf16.gmra.mrb[0].mxu0 %v346
    %v462 = vpop.f32.mrb[0].mxu0
    %v463 = vadd.f32 0.0, %v462
    %v464 = vpop.f32.mrb[0].mxu0
    %v465 = vpop.f32.mrb[0].mxu0
    %v466 = vadd.f32 0.0, %v465
    %v467 = vpop.f32.mrb[0].mxu0
    %468 = vmatprep.mubr.bf16.mxu0 0
    %469 = vmatmul.mubr.bf16.gmra.mrb[0].mxu0 %v349
    %v470 = vpop.f32.mrb[0].mxu0
    %v471 = vadd.f32 0.0, %v470
    %v472 = vpop.f32.mrb[0].mxu0
    %v473 = vpop.f32.mrb[0].mxu0
    %v474 = vadd.f32 0.0, %v473
    %v475 = vpop.f32.mrb[0].mxu0
    %476 = vmatprep.mubr.bf16.mxu0 0
    %477 = vmatmul.mubr.bf16.gmra.mrb[0].mxu0 %v352
    %v478 = vpop.f32.mrb[0].mxu0
    %v479 = vadd.f32 0.0, %v478
    %v480 = vpop.f32.mrb[0].mxu0
    %v481 = vpop.f32.mrb[0].mxu0
    %v482 = vadd.f32 0.0, %v481
    %v483 = vpop.f32.mrb[0].mxu0
    %484 = vmatprep.mubr.bf16.mxu0 0
    %485 = vmatmul.mubr.bf16.gmra.mrb[0].mxu0 %v355
    %v486 = vpop.f32.mrb[0].mxu0
    %v487 = vadd.f32 0.0, %v486
    %v488 = vpop.f32.mrb[0].mxu0
    %v489 = vpop.f32.mrb[0].mxu0
    %v490 = vadd.f32 0.0, %v489
    %v491 = vpop.f32.mrb[0].mxu0
    %492 = vmatprep.mubr.bf16.mxu0 0
    %493 = vmatmul.mubr.bf16.gmra.mrb[0].mxu0 %v358
    %v494 = vpop.f32.mrb[0].mxu0
    %v495 = vadd.f32 0.0, %v494
    %v496 = vpop.f32.mrb[0].mxu0
    %v497 = vpop.f32.mrb[0].mxu0
    %v498 = vadd.f32 0.0, %v497
    %v499 = vpop.f32.mrb[0].mxu0
    %500 = vmatprep.mubr.bf16.mxu0 0
    %501 = vmatmul.mubr.bf16.gmra.mrb[0].mxu0 %v361
    %v502 = vpop.f32.mrb[0].mxu0
    %v503 = vadd.f32 0.0, %v502
    %v504 = vpop.f32.mrb[0].mxu0
    %v505 = vpop.f32.mrb[0].mxu0
    %v506 = vadd.f32 0.0, %v505
    %v507 = vpop.f32.mrb[0].mxu0
    %508 = vmatprep.mubr.bf16.mxu0 0
    %509 = vmatmul.mubr.bf16.gmra.mrb[0].mxu0 %v364
    %v510 = vpop.f32.mrb[0].mxu0
    %v511 = vadd.f32 0.0, %v510
    %v512 = vpop.f32.mrb[0].mxu0
    %v513 = vpop.f32.mrb[0].mxu0
    %v514 = vadd.f32 0.0, %v513
    %v515 = vpop.f32.mrb[0].mxu0
    %516 = vmatprep.mubr.bf16.mxu0 0
    %517 = vmatmul.mubr.bf16.gmra.mrb[0].mxu0 %v367
    %v518 = vpop.f32.mrb[0].mxu0
    %v519 = vadd.f32 0.0, %v518
    %v520 = vpop.f32.mrb[0].mxu0
    %v521 = vpop.f32.mrb[0].mxu0
    %v522 = vadd.f32 0.0, %v521
    %v523 = vpop.f32.mrb[0].mxu0
    %524 = vmatprep.mubr.bf16.mxu0 0
    %525 = vmatmul.mubr.bf16.gmra.mrb[0].mxu0 %v370
    %v526 = vpop.f32.mrb[0].mxu0
    %v527 = vadd.f32 0.0, %v526
    %v528 = vpop.f32.mrb[0].mxu0
    %v529 = vpop.f32.mrb[0].mxu0
    %v530 = vadd.f32 0.0, %v529
    %v531 = vpop.f32.mrb[0].mxu0
    %532 = vdwg.mxu0
    %v533 = vadd.f32 %v407, %v410
    %v534 = vadd.f32 %v533, %v415
    %v535 = vadd.f32 %v534, %v418
    %v536 = vadd.f32 %v535, %v423
    %v537 = vadd.f32 %v536, %v426
    %v538 = vadd.f32 %v537, %v431
    %v539 = vadd.f32 %v538, %v434
    %v540 = vadd.f32 %v539, %v439
    %v541 = vadd.f32 %v540, %v442
    %v542 = vadd.f32 %v541, %v447
    %v543 = vadd.f32 %v542, %v450
    %v544 = vadd.f32 %v543, %v455
    %v545 = vadd.f32 %v544, %v458
    %v546 = vadd.f32 %v545, %v463
    %v547 = vadd.f32 %v546, %v466
    %v548 = vadd.f32 %v547, %v471
    %v549 = vadd.f32 %v548, %v474
    %v550 = vadd.f32 %v549, %v479
    %v551 = vadd.f32 %v550, %v482
    %v552 = vadd.f32 %v551, %v487
    %v553 = vadd.f32 %v552, %v490
    %v554 = vadd.f32 %v553, %v495
    %v555 = vadd.f32 %v554, %v498
    %v556 = vadd.f32 %v555, %v503
    %v557 = vadd.f32 %v556, %v506
    %v558 = vadd.f32 %v557, %v511
    %v559 = vadd.f32 %v558, %v514
    %v560 = vadd.f32 %v559, %v519
    %v561 = vadd.f32 %v560, %v522
    %v562 = vadd.f32 %v561, %v527
    %v563 = vadd.f32 %v562, %v530
    %v564 = vrot.slane %v563, 4
    %v565 = vadd.f32 %v563, %v564
    %v566 = vrot.slane %v565, 2
    %v567 = vadd.f32 %v565, %v566
    %v568 = vrot.slane %v567, 1
    %v569 = vadd.f32 %v567, %v568
    %v570 = vmul.f32 %v569, %v125
    %v571 = vmul.f32 %v407, %v407
    %v572 = vmul.f32 %v410, %v410
    %v573 = vmul.f32 %v415, %v415
    %v574 = vmul.f32 %v418, %v418
    %v575 = vmul.f32 %v423, %v423
    %v576 = vmul.f32 %v426, %v426
    %v577 = vmul.f32 %v431, %v431
    %v578 = vmul.f32 %v434, %v434
    %v579 = vmul.f32 %v439, %v439
    %v580 = vmul.f32 %v442, %v442
    %v581 = vmul.f32 %v447, %v447
    %v582 = vmul.f32 %v450, %v450
    %v583 = vmul.f32 %v455, %v455
    %v584 = vmul.f32 %v458, %v458
    %v585 = vmul.f32 %v463, %v463
    %v586 = vmul.f32 %v466, %v466
    %v587 = vmul.f32 %v471, %v471
    %v588 = vmul.f32 %v474, %v474
    %v589 = vmul.f32 %v479, %v479
    %v590 = vmul.f32 %v482, %v482
    %v591 = vmul.f32 %v487, %v487
    %v592 = vmul.f32 %v490, %v490
    %v593 = vmul.f32 %v495, %v495
    %v594 = vmul.f32 %v498, %v498
    %v595 = vmul.f32 %v503, %v503
    %v596 = vmul.f32 %v506, %v506
    %v597 = vmul.f32 %v511, %v511
    %v598 = vmul.f32 %v514, %v514
    %v599 = vmul.f32 %v519, %v519
    %v600 = vmul.f32 %v522, %v522
    %v601 = vmul.f32 %v527, %v527
    %v602 = vmul.f32 %v530, %v530
    %v603 = vadd.f32 %v571, %v572
    %v604 = vadd.f32 %v603, %v573
    %v605 = vadd.f32 %v604, %v574
    %v606 = vadd.f32 %v605, %v575
    %v607 = vadd.f32 %v606, %v576
    %v608 = vadd.f32 %v607, %v577
    %v609 = vadd.f32 %v608, %v578
    %v610 = vadd.f32 %v609, %v579
    %v611 = vadd.f32 %v610, %v580
    %v612 = vadd.f32 %v611, %v581
    %v613 = vadd.f32 %v612, %v582
    %v614 = vadd.f32 %v613, %v583
    %v615 = vadd.f32 %v614, %v584
    %v616 = vadd.f32 %v615, %v585
    %v617 = vadd.f32 %v616, %v586
    %v618 = vadd.f32 %v617, %v587
    %v619 = vadd.f32 %v618, %v588
    %v620 = vadd.f32 %v619, %v589
    %v621 = vadd.f32 %v620, %v590
    %v622 = vadd.f32 %v621, %v591
    %v623 = vadd.f32 %v622, %v592
    %v624 = vadd.f32 %v623, %v593
    %v625 = vadd.f32 %v624, %v594
    %v626 = vadd.f32 %v625, %v595
    %v627 = vadd.f32 %v626, %v596
    %v628 = vadd.f32 %v627, %v597
    %v629 = vadd.f32 %v628, %v598
    %v630 = vadd.f32 %v629, %v599
    %v631 = vadd.f32 %v630, %v600
    %v632 = vadd.f32 %v631, %v601
    %v633 = vadd.f32 %v632, %v602
    %v634 = vrot.slane %v633, 4
    %v635 = vadd.f32 %v633, %v634
    %v636 = vrot.slane %v635, 2
    %v637 = vadd.f32 %v635, %v636
    %v638 = vrot.slane %v637, 1
    %v639 = vadd.f32 %v637, %v638
    %v640 = vmul.f32 %v639, %v125
    %v641 = vmul.f32 %v570, %v570
    %v642 = vsub.f32 %v640, %v641
    %v643 = vmax.f32 %v642, 0.0
    %v644 = vadd.f32 %v643, 1e-05
    %v645 = vrsqrt.pop %v644
    %v646 = vmul.f32 %v22, %v645
    %v647 = vmul.f32 %v570, %v646
    %v649 = vrot.slane %v647, 7
    %v651 = vsub.f32 %v22, %v649
    %v652 = vlaneseq
    %v653 = vshrl.u32 %v652, 7
    %v654 = vsub.s32 0, %v653
    %v655 = vrot.slane %v646, %v654
    %v656 = vmul.f32 %v407, %v655
    %v657 = vmul.f32 %v410, %v655
    %v658 = vmul.f32 %v415, %v655
    %v659 = vmul.f32 %v418, %v655
    %v660 = vmul.f32 %v423, %v655
    %v661 = vmul.f32 %v426, %v655
    %v662 = vmul.f32 %v431, %v655
    %v663 = vmul.f32 %v434, %v655
    %v664 = vmul.f32 %v439, %v655
    %v665 = vmul.f32 %v442, %v655
    %v666 = vmul.f32 %v447, %v655
    %v667 = vmul.f32 %v450, %v655
    %v668 = vmul.f32 %v455, %v655
    %v669 = vmul.f32 %v458, %v655
    %v670 = vmul.f32 %v463, %v655
    %v671 = vmul.f32 %v466, %v655
    %v672 = vmul.f32 %v471, %v655
    %v673 = vmul.f32 %v474, %v655
    %v674 = vmul.f32 %v479, %v655
    %v675 = vmul.f32 %v482, %v655
    %v676 = vmul.f32 %v487, %v655
    %v677 = vmul.f32 %v490, %v655
    %v678 = vmul.f32 %v495, %v655
    %v679 = vmul.f32 %v498, %v655
    %v680 = vmul.f32 %v503, %v655
    %v681 = vmul.f32 %v506, %v655
    %v682 = vmul.f32 %v511, %v655
    %v683 = vmul.f32 %v514, %v655
    %v684 = vmul.f32 %v519, %v655
    %v685 = vmul.f32 %v522, %v655
    %v686 = vmul.f32 %v527, %v655
    %v687 = vmul.f32 %v530, %v655
    %v688 = vlaneseq
    %v689 = vshrl.u32 %v688, 7
    %v690 = vsub.s32 1, %v689
    %v691 = vrot.slane %v651, %v690
    %v692 = vadd.f32 %v656, %v691
    %v693 = vadd.f32 %v657, %v691
    %v694 = vadd.f32 %v658, %v691
    %v695 = vadd.f32 %v659, %v691
    %v696 = vadd.f32 %v660, %v691
    %v697 = vadd.f32 %v661, %v691
    %v698 = vadd.f32 %v662, %v691
    %v699 = vadd.f32 %v663, %v691
    %v700 = vadd.f32 %v664, %v691
    %v701 = vadd.f32 %v665, %v691
    %v702 = vadd.f32 %v666, %v691
    %v703 = vadd.f32 %v667, %v691
    %v704 = vadd.f32 %v668, %v691
    %v705 = vadd.f32 %v669, %v691
    %v706 = vadd.f32 %v670, %v691
    %v707 = vadd.f32 %v671, %v691
    %v708 = vadd.f32 %v672, %v691
    %v709 = vadd.f32 %v673, %v691
    %v710 = vadd.f32 %v674, %v691
    %v711 = vadd.f32 %v675, %v691
    %v712 = vadd.f32 %v676, %v691
    %v713 = vadd.f32 %v677, %v691
    %v714 = vadd.f32 %v678, %v691
    %v715 = vadd.f32 %v679, %v691
    %v716 = vadd.f32 %v680, %v691
    %v717 = vadd.f32 %v681, %v691
    %v718 = vadd.f32 %v682, %v691
    %v719 = vadd.f32 %v683, %v691
    %v720 = vadd.f32 %v684, %v691
    %v721 = vadd.f32 %v685, %v691
    %v722 = vadd.f32 %v686, %v691
    %v723 = vadd.f32 %v687, %v691
    %v724 = vmax.f32 %v692, 0.0
    %v725 = vmax.f32 %v693, 0.0
    %v726 = vmax.f32 %v694, 0.0
    %v727 = vmax.f32 %v695, 0.0
    %v728 = vmax.f32 %v696, 0.0
    %v729 = vmax.f32 %v697, 0.0
    %v730 = vmax.f32 %v698, 0.0
    %v731 = vmax.f32 %v699, 0.0
    %v732 = vmax.f32 %v700, 0.0
    %v733 = vmax.f32 %v701, 0.0
    %v734 = vmax.f32 %v702, 0.0
    %v735 = vmax.f32 %v703, 0.0
    %v736 = vmax.f32 %v704, 0.0
    %v737 = vmax.f32 %v705, 0.0
    %v738 = vmax.f32 %v706, 0.0
    %v739 = vmax.f32 %v707, 0.0
    %v740 = vmax.f32 %v708, 0.0
    %v741 = vmax.f32 %v709, 0.0
    %v742 = vmax.f32 %v710, 0.0
    %v743 = vmax.f32 %v711, 0.0
    %v744 = vmax.f32 %v712, 0.0
    %v745 = vmax.f32 %v713, 0.0
    %v746 = vmax.f32 %v714, 0.0
    %v747 = vmax.f32 %v715, 0.0
    %v748 = vmax.f32 %v716, 0.0
    %v749 = vmax.f32 %v717, 0.0
    %v750 = vmax.f32 %v718, 0.0
    %v751 = vmax.f32 %v719, 0.0
    %v752 = vmax.f32 %v720, 0.0
    %v753 = vmax.f32 %v721, 0.0
    %v754 = vmax.f32 %v722, 0.0
    %v755 = vmax.f32 %v723, 0.0
    %v756 = vpack.c.bf16 %v725, %v724
    %v757 = vpack.c.bf16 %v727, %v726
    %v758 = vpack.c.bf16 %v729, %v728
    %v759 = vpack.c.bf16 %v731, %v730
    %v760 = vpack.c.bf16 %v733, %v732
    %v761 = vpack.c.bf16 %v735, %v734
    %v762 = vpack.c.bf16 %v737, %v736
    %v763 = vpack.c.bf16 %v739, %v738
    %v764 = vpack.c.bf16 %v741, %v740
    %v765 = vpack.c.bf16 %v743, %v742
    %v766 = vpack.c.bf16 %v745, %v744
    %v767 = vpack.c.bf16 %v747, %v746
    %v768 = vpack.c.bf16 %v749, %v748
    %v769 = vpack.c.bf16 %v751, %v750
    %v770 = vpack.c.bf16 %v753, %v752
    %v771 = vpack.c.bf16 %v755, %v754
    %v772 = vld [vmem:[%s2] sm:$0xf]
    %v773 = vld [vmem:[%s2 + $0x4] sm:$0xf]
    %v774 = vld [vmem:[%s2 + $0x8] sm:$0xf]
    %v775 = vld [vmem:[%s2 + $0xc] sm:$0xf]
    %v776 = vld [vmem:[%s2 + $0x10] sm:$0xf]
    %v777 = vld [vmem:[%s2 + $0x14] sm:$0xf]
    %v778 = vld [vmem:[%s2 + $0x18] sm:$0xf]
    %v779 = vld [vmem:[%s2 + $0x1c] sm:$0xf]
    %v780 = vld [vmem:[%s2 + $0x20] sm:$0xf]
    %v781 = vld [vmem:[%s2 + $0x24] sm:$0xf]
    %v782 = vld [vmem:[%s2 + $0x28] sm:$0xf]
    %v783 = vld [vmem:[%s2 + $0x2c] sm:$0xf]
    %v784 = vld [vmem:[%s2 + $0x30] sm:$0xf]
    %v785 = vld [vmem:[%s2 + $0x34] sm:$0xf]
    %v786 = vld [vmem:[%s2 + $0x38] sm:$0xf]
    %v787 = vld [vmem:[%s2 + $0x3c] sm:$0xf]
    %v804 = vunpack.c.l.b16 %v772
    %v805 = vunpack.c.l.b16 %v773
    %v806 = vunpack.c.l.b16 %v774
    %v807 = vunpack.c.l.b16 %v775
    %v808 = vunpack.c.l.b16 %v776
    %v809 = vunpack.c.l.b16 %v777
    %v810 = vunpack.c.l.b16 %v778
    %v811 = vunpack.c.l.b16 %v779
    %v812 = vunpack.c.l.b16 %v780
    %v813 = vunpack.c.l.b16 %v781
    %v814 = vunpack.c.l.b16 %v782
    %v815 = vunpack.c.l.b16 %v783
    %v816 = vunpack.c.l.b16 %v784
    %v817 = vunpack.c.l.b16 %v785
    %v818 = vunpack.c.l.b16 %v786
    %v819 = vunpack.c.l.b16 %v787
    %v820 = vpack.c.b16 %v805, %v804
    %v821 = vpack.c.b16 %v807, %v806
    %v822 = vpack.c.b16 %v809, %v808
    %v823 = vpack.c.b16 %v811, %v810
    %v824 = vpack.c.b16 %v813, %v812
    %v825 = vpack.c.b16 %v815, %v814
    %v826 = vpack.c.b16 %v817, %v816
    %v827 = vpack.c.b16 %v819, %v818
    %836 = vmatprep.subr.bf16.mxu0 0
    %837 = vmatpush1.bf16.msra.mxu0 %v820
    %838 = vmatprep.subr.bf16.mxu0 0
    %839 = vmatpush1.bf16.msra.mxu0 %v821
    %840 = vmatprep.subr.bf16.mxu0 0
    %841 = vmatpush1.bf16.msra.mxu0 %v822
    %842 = vmatprep.subr.bf16.mxu0 0
    %843 = vmatpush1.bf16.msra.mxu0 %v823
    %844 = vmatprep.subr.bf16.mxu0 0
    %845 = vmatpush1.bf16.msra.mxu0 %v824
    %846 = vmatprep.subr.bf16.mxu0 0
    %847 = vmatpush1.bf16.msra.mxu0 %v825
    %848 = vmatprep.subr.bf16.mxu0 0
    %849 = vmatpush1.bf16.msra.mxu0 %v826
    %850 = vmatprep.subr.bf16.mxu0 0
    %851 = vmatpush1.bf16.msra.mxu0 %v827
    %852 = vmatprep.subr.bf16.mxu0 0
    %853 = vmatpush1.bf16.msra.mxu0 0
    %854 = vmatprep.subr.bf16.mxu0 0
    %855 = vmatpush1.bf16.msra.mxu0 0
    %856 = vmatprep.subr.bf16.mxu0 0
    %857 = vmatpush1.bf16.msra.mxu0 0
    %858 = vmatprep.subr.bf16.mxu0 0
    %859 = vmatpush1.bf16.msra.mxu0 0
    %860 = vmatprep.subr.bf16.mxu0 0
    %861 = vmatpush1.bf16.msra.mxu0 0
    %862 = vmatprep.subr.bf16.mxu0 0
    %863 = vmatpush1.bf16.msra.mxu0 0
    %864 = vmatprep.subr.bf16.mxu0 0
    %865 = vmatpush1.bf16.msra.mxu0 0
    %866 = vmatprep.subr.bf16.mxu0 0
    %867 = vmatpush1.bf16.msra.mxu0 0
    %868 = vmatprep.mubr.bf16.mxu0 0
    %869 = vmatmul.mubr.bf16.gmra.mrb[0].mxu0 %v756
    %v870 = vpop.f32.mrb[0].mxu0
    %v871 = vadd.f32 0.0, %v870
    %v872 = vpop.f32.mrb[0].mxu0
    %v873 = vpop.f32.mrb[0].mxu0
    %v874 = vadd.f32 0.0, %v873
    %v875 = vpop.f32.mrb[0].mxu0
    %876 = vmatprep.mubr.bf16.mxu0 0
    %877 = vmatmul.mubr.bf16.gmra.mrb[0].mxu0 %v757
    %v878 = vpop.f32.mrb[0].mxu0
    %v879 = vadd.f32 0.0, %v878
    %v880 = vpop.f32.mrb[0].mxu0
    %v881 = vpop.f32.mrb[0].mxu0
    %v882 = vadd.f32 0.0, %v881
    %v883 = vpop.f32.mrb[0].mxu0
    %884 = vmatprep.mubr.bf16.mxu0 0
    %885 = vmatmul.mubr.bf16.gmra.mrb[0].mxu0 %v758
    %v886 = vpop.f32.mrb[0].mxu0
    %v887 = vadd.f32 0.0, %v886
    %v888 = vpop.f32.mrb[0].mxu0
    %v889 = vpop.f32.mrb[0].mxu0
    %v890 = vadd.f32 0.0, %v889
    %v891 = vpop.f32.mrb[0].mxu0
    %892 = vmatprep.mubr.bf16.mxu0 0
    %893 = vmatmul.mubr.bf16.gmra.mrb[0].mxu0 %v759
    %v894 = vpop.f32.mrb[0].mxu0
    %v895 = vadd.f32 0.0, %v894
    %v896 = vpop.f32.mrb[0].mxu0
    %v897 = vpop.f32.mrb[0].mxu0
    %v898 = vadd.f32 0.0, %v897
    %v899 = vpop.f32.mrb[0].mxu0
    %900 = vmatprep.mubr.bf16.mxu0 0
    %901 = vmatmul.mubr.bf16.gmra.mrb[0].mxu0 %v760
    %v902 = vpop.f32.mrb[0].mxu0
    %v903 = vadd.f32 0.0, %v902
    %v904 = vpop.f32.mrb[0].mxu0
    %v905 = vpop.f32.mrb[0].mxu0
    %v906 = vadd.f32 0.0, %v905
    %v907 = vpop.f32.mrb[0].mxu0
    %908 = vmatprep.mubr.bf16.mxu0 0
    %909 = vmatmul.mubr.bf16.gmra.mrb[0].mxu0 %v761
    %v910 = vpop.f32.mrb[0].mxu0
    %v911 = vadd.f32 0.0, %v910
    %v912 = vpop.f32.mrb[0].mxu0
    %v913 = vpop.f32.mrb[0].mxu0
    %v914 = vadd.f32 0.0, %v913
    %v915 = vpop.f32.mrb[0].mxu0
    %916 = vmatprep.mubr.bf16.mxu0 0
    %917 = vmatmul.mubr.bf16.gmra.mrb[0].mxu0 %v762
    %v918 = vpop.f32.mrb[0].mxu0
    %v919 = vadd.f32 0.0, %v918
    %v920 = vpop.f32.mrb[0].mxu0
    %v921 = vpop.f32.mrb[0].mxu0
    %v922 = vadd.f32 0.0, %v921
    %v923 = vpop.f32.mrb[0].mxu0
    %924 = vmatprep.mubr.bf16.mxu0 0
    %925 = vmatmul.mubr.bf16.gmra.mrb[0].mxu0 %v763
    %v926 = vpop.f32.mrb[0].mxu0
    %v927 = vadd.f32 0.0, %v926
    %v928 = vpop.f32.mrb[0].mxu0
    %v929 = vpop.f32.mrb[0].mxu0
    %v930 = vadd.f32 0.0, %v929
    %v931 = vpop.f32.mrb[0].mxu0
    %932 = vmatprep.mubr.bf16.mxu0 0
    %933 = vmatmul.mubr.bf16.gmra.mrb[0].mxu0 %v764
    %v934 = vpop.f32.mrb[0].mxu0
    %v935 = vadd.f32 0.0, %v934
    %v936 = vpop.f32.mrb[0].mxu0
    %v937 = vpop.f32.mrb[0].mxu0
    %v938 = vadd.f32 0.0, %v937
    %v939 = vpop.f32.mrb[0].mxu0
    %940 = vmatprep.mubr.bf16.mxu0 0
    %941 = vmatmul.mubr.bf16.gmra.mrb[0].mxu0 %v765
    %v942 = vpop.f32.mrb[0].mxu0
    %v943 = vadd.f32 0.0, %v942
    %v944 = vpop.f32.mrb[0].mxu0
    %v945 = vpop.f32.mrb[0].mxu0
    %v946 = vadd.f32 0.0, %v945
    %v947 = vpop.f32.mrb[0].mxu0
    %948 = vmatprep.mubr.bf16.mxu0 0
    %949 = vmatmul.mubr.bf16.gmra.mrb[0].mxu0 %v766
    %v950 = vpop.f32.mrb[0].mxu0
    %v951 = vadd.f32 0.0, %v950
    %v952 = vpop.f32.mrb[0].mxu0
    %v953 = vpop.f32.mrb[0].mxu0
    %v954 = vadd.f32 0.0, %v953
    %v955 = vpop.f32.mrb[0].mxu0
    %956 = vmatprep.mubr.bf16.mxu0 0
    %957 = vmatmul.mubr.bf16.gmra.mrb[0].mxu0 %v767
    %v958 = vpop.f32.mrb[0].mxu0
    %v959 = vadd.f32 0.0, %v958
    %v960 = vpop.f32.mrb[0].mxu0
    %v961 = vpop.f32.mrb[0].mxu0
    %v962 = vadd.f32 0.0, %v961
    %v963 = vpop.f32.mrb[0].mxu0
    %964 = vmatprep.mubr.bf16.mxu0 0
    %965 = vmatmul.mubr.bf16.gmra.mrb[0].mxu0 %v768
    %v966 = vpop.f32.mrb[0].mxu0
    %v967 = vadd.f32 0.0, %v966
    %v968 = vpop.f32.mrb[0].mxu0
    %v969 = vpop.f32.mrb[0].mxu0
    %v970 = vadd.f32 0.0, %v969
    %v971 = vpop.f32.mrb[0].mxu0
    %972 = vmatprep.mubr.bf16.mxu0 0
    %973 = vmatmul.mubr.bf16.gmra.mrb[0].mxu0 %v769
    %v974 = vpop.f32.mrb[0].mxu0
    %v975 = vadd.f32 0.0, %v974
    %v976 = vpop.f32.mrb[0].mxu0
    %v977 = vpop.f32.mrb[0].mxu0
    %v978 = vadd.f32 0.0, %v977
    %v979 = vpop.f32.mrb[0].mxu0
    %980 = vmatprep.mubr.bf16.mxu0 0
    %981 = vmatmul.mubr.bf16.gmra.mrb[0].mxu0 %v770
    %v982 = vpop.f32.mrb[0].mxu0
    %v983 = vadd.f32 0.0, %v982
    %v984 = vpop.f32.mrb[0].mxu0
    %v985 = vpop.f32.mrb[0].mxu0
    %v986 = vadd.f32 0.0, %v985
    %v987 = vpop.f32.mrb[0].mxu0
    %988 = vmatprep.mubr.bf16.mxu0 0
    %989 = vmatmul.mubr.bf16.gmra.mrb[0].mxu0 %v771
    %v990 = vpop.f32.mrb[0].mxu0
    %v991 = vadd.f32 0.0, %v990
    %v992 = vpop.f32.mrb[0].mxu0
    %v993 = vpop.f32.mrb[0].mxu0
    %v994 = vadd.f32 0.0, %v993
    %v995 = vpop.f32.mrb[0].mxu0
    %996 = vdwg.mxu0
    %v997 = vadd.f32 %v871, %v874
    %v998 = vadd.f32 %v997, %v879
    %v999 = vadd.f32 %v998, %v882
    %v1000 = vadd.f32 %v999, %v887
    %v1001 = vadd.f32 %v1000, %v890
    %v1002 = vadd.f32 %v1001, %v895
    %v1003 = vadd.f32 %v1002, %v898
    %v1004 = vadd.f32 %v1003, %v903
    %v1005 = vadd.f32 %v1004, %v906
    %v1006 = vadd.f32 %v1005, %v911
    %v1007 = vadd.f32 %v1006, %v914
    %v1008 = vadd.f32 %v1007, %v919
    %v1009 = vadd.f32 %v1008, %v922
    %v1010 = vadd.f32 %v1009, %v927
    %v1011 = vadd.f32 %v1010, %v930
    %v1012 = vadd.f32 %v1011, %v935
    %v1013 = vadd.f32 %v1012, %v938
    %v1014 = vadd.f32 %v1013, %v943
    %v1015 = vadd.f32 %v1014, %v946
    %v1016 = vadd.f32 %v1015, %v951
    %v1017 = vadd.f32 %v1016, %v954
    %v1018 = vadd.f32 %v1017, %v959
    %v1019 = vadd.f32 %v1018, %v962
    %v1020 = vadd.f32 %v1019, %v967
    %v1021 = vadd.f32 %v1020, %v970
    %v1022 = vadd.f32 %v1021, %v975
    %v1023 = vadd.f32 %v1022, %v978
    %v1024 = vadd.f32 %v1023, %v983
    %v1025 = vadd.f32 %v1024, %v986
    %v1026 = vadd.f32 %v1025, %v991
    %v1027 = vadd.f32 %v1026, %v994
    %v1028 = vrot.slane %v1027, 4
    %v1029 = vadd.f32 %v1027, %v1028
    %v1030 = vrot.slane %v1029, 2
    %v1031 = vadd.f32 %v1029, %v1030
    %v1032 = vrot.slane %v1031, 1
    %v1033 = vadd.f32 %v1031, %v1032
    %v1034 = vmul.f32 %v1033, %v125
    %v1035 = vmul.f32 %v871, %v871
    %v1036 = vmul.f32 %v874, %v874
    %v1037 = vmul.f32 %v879, %v879
    %v1038 = vmul.f32 %v882, %v882
    %v1039 = vmul.f32 %v887, %v887
    %v1040 = vmul.f32 %v890, %v890
    %v1041 = vmul.f32 %v895, %v895
    %v1042 = vmul.f32 %v898, %v898
    %v1043 = vmul.f32 %v903, %v903
    %v1044 = vmul.f32 %v906, %v906
    %v1045 = vmul.f32 %v911, %v911
    %v1046 = vmul.f32 %v914, %v914
    %v1047 = vmul.f32 %v919, %v919
    %v1048 = vmul.f32 %v922, %v922
    %v1049 = vmul.f32 %v927, %v927
    %v1050 = vmul.f32 %v930, %v930
    %v1051 = vmul.f32 %v935, %v935
    %v1052 = vmul.f32 %v938, %v938
    %v1053 = vmul.f32 %v943, %v943
    %v1054 = vmul.f32 %v946, %v946
    %v1055 = vmul.f32 %v951, %v951
    %v1056 = vmul.f32 %v954, %v954
    %v1057 = vmul.f32 %v959, %v959
    %v1058 = vmul.f32 %v962, %v962
    %v1059 = vmul.f32 %v967, %v967
    %v1060 = vmul.f32 %v970, %v970
    %v1061 = vmul.f32 %v975, %v975
    %v1062 = vmul.f32 %v978, %v978
    %v1063 = vmul.f32 %v983, %v983
    %v1064 = vmul.f32 %v986, %v986
    %v1065 = vmul.f32 %v991, %v991
    %v1066 = vmul.f32 %v994, %v994
    %v1067 = vadd.f32 %v1035, %v1036
    %v1068 = vadd.f32 %v1067, %v1037
    %v1069 = vadd.f32 %v1068, %v1038
    %v1070 = vadd.f32 %v1069, %v1039
    %v1071 = vadd.f32 %v1070, %v1040
    %v1072 = vadd.f32 %v1071, %v1041
    %v1073 = vadd.f32 %v1072, %v1042
    %v1074 = vadd.f32 %v1073, %v1043
    %v1075 = vadd.f32 %v1074, %v1044
    %v1076 = vadd.f32 %v1075, %v1045
    %v1077 = vadd.f32 %v1076, %v1046
    %v1078 = vadd.f32 %v1077, %v1047
    %v1079 = vadd.f32 %v1078, %v1048
    %v1080 = vadd.f32 %v1079, %v1049
    %v1081 = vadd.f32 %v1080, %v1050
    %v1082 = vadd.f32 %v1081, %v1051
    %v1083 = vadd.f32 %v1082, %v1052
    %v1084 = vadd.f32 %v1083, %v1053
    %v1085 = vadd.f32 %v1084, %v1054
    %v1086 = vadd.f32 %v1085, %v1055
    %v1087 = vadd.f32 %v1086, %v1056
    %v1088 = vadd.f32 %v1087, %v1057
    %v1089 = vadd.f32 %v1088, %v1058
    %v1090 = vadd.f32 %v1089, %v1059
    %v1091 = vadd.f32 %v1090, %v1060
    %v1092 = vadd.f32 %v1091, %v1061
    %v1093 = vadd.f32 %v1092, %v1062
    %v1094 = vadd.f32 %v1093, %v1063
    %v1095 = vadd.f32 %v1094, %v1064
    %v1096 = vadd.f32 %v1095, %v1065
    %v1097 = vadd.f32 %v1096, %v1066
    %v1098 = vrot.slane %v1097, 4
    %v1099 = vadd.f32 %v1097, %v1098
    %v1100 = vrot.slane %v1099, 2
    %v1101 = vadd.f32 %v1099, %v1100
    %v1102 = vrot.slane %v1101, 1
    %v1103 = vadd.f32 %v1101, %v1102
    %v1104 = vmul.f32 %v1103, %v125
    %v1105 = vmul.f32 %v1034, %v1034
    %v1106 = vsub.f32 %v1104, %v1105
    %v1107 = vmax.f32 %v1106, 0.0
    %v1108 = vadd.f32 %v1107, 1e-05
    %v1109 = vrsqrt.pop %v1108
    %v1110 = vmul.f32 %v22, %v1109
    %v1111 = vmul.f32 %v1034, %v1110
    %v1113 = vrot.slane %v1111, 7
    %v1115 = vsub.f32 %v22, %v1113
    %v1116 = vlaneseq
    %v1117 = vshrl.u32 %v1116, 7
    %v1118 = vsub.s32 2, %v1117
    %v1119 = vrot.slane %v1110, %v1118
    %v1120 = vmul.f32 %v871, %v1119
    %v1121 = vmul.f32 %v874, %v1119
    %v1122 = vmul.f32 %v879, %v1119
    %v1123 = vmul.f32 %v882, %v1119
    %v1124 = vmul.f32 %v887, %v1119
    %v1125 = vmul.f32 %v890, %v1119
    %v1126 = vmul.f32 %v895, %v1119
    %v1127 = vmul.f32 %v898, %v1119
    %v1128 = vmul.f32 %v903, %v1119
    %v1129 = vmul.f32 %v906, %v1119
    %v1130 = vmul.f32 %v911, %v1119
    %v1131 = vmul.f32 %v914, %v1119
    %v1132 = vmul.f32 %v919, %v1119
    %v1133 = vmul.f32 %v922, %v1119
    %v1134 = vmul.f32 %v927, %v1119
    %v1135 = vmul.f32 %v930, %v1119
    %v1136 = vmul.f32 %v935, %v1119
    %v1137 = vmul.f32 %v938, %v1119
    %v1138 = vmul.f32 %v943, %v1119
    %v1139 = vmul.f32 %v946, %v1119
    %v1140 = vmul.f32 %v951, %v1119
    %v1141 = vmul.f32 %v954, %v1119
    %v1142 = vmul.f32 %v959, %v1119
    %v1143 = vmul.f32 %v962, %v1119
    %v1144 = vmul.f32 %v967, %v1119
    %v1145 = vmul.f32 %v970, %v1119
    %v1146 = vmul.f32 %v975, %v1119
    %v1147 = vmul.f32 %v978, %v1119
    %v1148 = vmul.f32 %v983, %v1119
    %v1149 = vmul.f32 %v986, %v1119
    %v1150 = vmul.f32 %v991, %v1119
    %v1151 = vmul.f32 %v994, %v1119
    %v1152 = vlaneseq
    %v1153 = vshrl.u32 %v1152, 7
    %v1154 = vsub.s32 3, %v1153
    %v1155 = vrot.slane %v1115, %v1154
    %v1156 = vadd.f32 %v1120, %v1155
    %v1157 = vadd.f32 %v1121, %v1155
    %v1158 = vadd.f32 %v1122, %v1155
    %v1159 = vadd.f32 %v1123, %v1155
    %v1160 = vadd.f32 %v1124, %v1155
    %v1161 = vadd.f32 %v1125, %v1155
    %v1162 = vadd.f32 %v1126, %v1155
    %v1163 = vadd.f32 %v1127, %v1155
    %v1164 = vadd.f32 %v1128, %v1155
    %v1165 = vadd.f32 %v1129, %v1155
    %v1166 = vadd.f32 %v1130, %v1155
    %v1167 = vadd.f32 %v1131, %v1155
    %v1168 = vadd.f32 %v1132, %v1155
    %v1169 = vadd.f32 %v1133, %v1155
    %v1170 = vadd.f32 %v1134, %v1155
    %v1171 = vadd.f32 %v1135, %v1155
    %v1172 = vadd.f32 %v1136, %v1155
    %v1173 = vadd.f32 %v1137, %v1155
    %v1174 = vadd.f32 %v1138, %v1155
    %v1175 = vadd.f32 %v1139, %v1155
    %v1176 = vadd.f32 %v1140, %v1155
    %v1177 = vadd.f32 %v1141, %v1155
    %v1178 = vadd.f32 %v1142, %v1155
    %v1179 = vadd.f32 %v1143, %v1155
    %v1180 = vadd.f32 %v1144, %v1155
    %v1181 = vadd.f32 %v1145, %v1155
    %v1182 = vadd.f32 %v1146, %v1155
    %v1183 = vadd.f32 %v1147, %v1155
    %v1184 = vadd.f32 %v1148, %v1155
    %v1185 = vadd.f32 %v1149, %v1155
    %v1186 = vadd.f32 %v1150, %v1155
    %v1187 = vadd.f32 %v1151, %v1155
    %v1188 = vmax.f32 %v1156, 0.0
    %v1189 = vmax.f32 %v1157, 0.0
    %v1190 = vmax.f32 %v1158, 0.0
    %v1191 = vmax.f32 %v1159, 0.0
    %v1192 = vmax.f32 %v1160, 0.0
    %v1193 = vmax.f32 %v1161, 0.0
    %v1194 = vmax.f32 %v1162, 0.0
    %v1195 = vmax.f32 %v1163, 0.0
    %v1196 = vmax.f32 %v1164, 0.0
    %v1197 = vmax.f32 %v1165, 0.0
    %v1198 = vmax.f32 %v1166, 0.0
    %v1199 = vmax.f32 %v1167, 0.0
    %v1200 = vmax.f32 %v1168, 0.0
    %v1201 = vmax.f32 %v1169, 0.0
    %v1202 = vmax.f32 %v1170, 0.0
    %v1203 = vmax.f32 %v1171, 0.0
    %v1204 = vmax.f32 %v1172, 0.0
    %v1205 = vmax.f32 %v1173, 0.0
    %v1206 = vmax.f32 %v1174, 0.0
    %v1207 = vmax.f32 %v1175, 0.0
    %v1208 = vmax.f32 %v1176, 0.0
    %v1209 = vmax.f32 %v1177, 0.0
    %v1210 = vmax.f32 %v1178, 0.0
    %v1211 = vmax.f32 %v1179, 0.0
    %v1212 = vmax.f32 %v1180, 0.0
    %v1213 = vmax.f32 %v1181, 0.0
    %v1214 = vmax.f32 %v1182, 0.0
    %v1215 = vmax.f32 %v1183, 0.0
    %v1216 = vmax.f32 %v1184, 0.0
    %v1217 = vmax.f32 %v1185, 0.0
    %v1218 = vmax.f32 %v1186, 0.0
    %v1219 = vmax.f32 %v1187, 0.0
    %v1220 = vpack.c.bf16 %v1189, %v1188
    %v1221 = vpack.c.bf16 %v1191, %v1190
    %v1222 = vpack.c.bf16 %v1193, %v1192
    %v1223 = vpack.c.bf16 %v1195, %v1194
    %v1224 = vpack.c.bf16 %v1197, %v1196
    %v1225 = vpack.c.bf16 %v1199, %v1198
    %v1226 = vpack.c.bf16 %v1201, %v1200
    %v1227 = vpack.c.bf16 %v1203, %v1202
    %v1228 = vpack.c.bf16 %v1205, %v1204
    %v1229 = vpack.c.bf16 %v1207, %v1206
    %v1230 = vpack.c.bf16 %v1209, %v1208
    %v1231 = vpack.c.bf16 %v1211, %v1210
    %v1232 = vpack.c.bf16 %v1213, %v1212
    %v1233 = vpack.c.bf16 %v1215, %v1214
    %v1234 = vpack.c.bf16 %v1217, %v1216
    %v1235 = vpack.c.bf16 %v1219, %v1218
    %v1236 = vld [vmem:[%s3] sm:$0xf]
    %v1237 = vld [vmem:[%s3 + $0x4] sm:$0xf]
    %v1238 = vld [vmem:[%s3 + $0x8] sm:$0xf]
    %v1239 = vld [vmem:[%s3 + $0xc] sm:$0xf]
    %v1240 = vld [vmem:[%s3 + $0x10] sm:$0xf]
    %v1241 = vld [vmem:[%s3 + $0x14] sm:$0xf]
    %v1242 = vld [vmem:[%s3 + $0x18] sm:$0xf]
    %v1243 = vld [vmem:[%s3 + $0x1c] sm:$0xf]
    %v1244 = vld [vmem:[%s3 + $0x20] sm:$0xf]
    %v1245 = vld [vmem:[%s3 + $0x24] sm:$0xf]
    %v1246 = vld [vmem:[%s3 + $0x28] sm:$0xf]
    %v1247 = vld [vmem:[%s3 + $0x2c] sm:$0xf]
    %v1248 = vld [vmem:[%s3 + $0x30] sm:$0xf]
    %v1249 = vld [vmem:[%s3 + $0x34] sm:$0xf]
    %v1250 = vld [vmem:[%s3 + $0x38] sm:$0xf]
    %v1251 = vld [vmem:[%s3 + $0x3c] sm:$0xf]
    %v1252 = vlaneseq
    %v1253 = vshrl.u32 %v1252, 7
    %v1254 = vsub.s32 4, %v1253
    %v1255 = vrot.slane %v22, %v1254
    %v1272 = vunpack.c.l.b16 %v1236
    %v1273 = vunpack.c.l.b16 %v1237
    %v1274 = vunpack.c.l.b16 %v1238
    %v1275 = vunpack.c.l.b16 %v1239
    %v1276 = vunpack.c.l.b16 %v1240
    %v1277 = vunpack.c.l.b16 %v1241
    %v1278 = vunpack.c.l.b16 %v1242
    %v1279 = vunpack.c.l.b16 %v1243
    %v1280 = vunpack.c.l.b16 %v1244
    %v1281 = vunpack.c.l.b16 %v1245
    %v1282 = vunpack.c.l.b16 %v1246
    %v1283 = vunpack.c.l.b16 %v1247
    %v1284 = vunpack.c.l.b16 %v1248
    %v1285 = vunpack.c.l.b16 %v1249
    %v1286 = vunpack.c.l.b16 %v1250
    %v1287 = vunpack.c.l.b16 %v1251
    %v1288 = vpack.c.b16 %v1273, %v1272
    %v1289 = vpack.c.b16 %v1275, %v1274
    %v1290 = vpack.c.b16 %v1277, %v1276
    %v1291 = vpack.c.b16 %v1279, %v1278
    %v1292 = vpack.c.b16 %v1281, %v1280
    %v1293 = vpack.c.b16 %v1283, %v1282
    %v1294 = vpack.c.b16 %v1285, %v1284
    %v1295 = vpack.c.b16 %v1287, %v1286
    %1304 = vmatprep.subr.bf16.mxu0 0
    %1305 = vmatpush1.bf16.msra.mxu0 %v1288
    %1306 = vmatprep.subr.bf16.mxu0 0
    %1307 = vmatpush1.bf16.msra.mxu0 %v1289
    %1308 = vmatprep.subr.bf16.mxu0 0
    %1309 = vmatpush1.bf16.msra.mxu0 %v1290
    %1310 = vmatprep.subr.bf16.mxu0 0
    %1311 = vmatpush1.bf16.msra.mxu0 %v1291
    %1312 = vmatprep.subr.bf16.mxu0 0
    %1313 = vmatpush1.bf16.msra.mxu0 %v1292
    %1314 = vmatprep.subr.bf16.mxu0 0
    %1315 = vmatpush1.bf16.msra.mxu0 %v1293
    %1316 = vmatprep.subr.bf16.mxu0 0
    %1317 = vmatpush1.bf16.msra.mxu0 %v1294
    %1318 = vmatprep.subr.bf16.mxu0 0
    %1319 = vmatpush1.bf16.msra.mxu0 %v1295
    %1320 = vmatprep.subr.bf16.mxu0 0
    %1321 = vmatpush1.bf16.msra.mxu0 0
    %1322 = vmatprep.subr.bf16.mxu0 0
    %1323 = vmatpush1.bf16.msra.mxu0 0
    %1324 = vmatprep.subr.bf16.mxu0 0
    %1325 = vmatpush1.bf16.msra.mxu0 0
    %1326 = vmatprep.subr.bf16.mxu0 0
    %1327 = vmatpush1.bf16.msra.mxu0 0
    %1328 = vmatprep.subr.bf16.mxu0 0
    %1329 = vmatpush1.bf16.msra.mxu0 0
    %1330 = vmatprep.subr.bf16.mxu0 0
    %1331 = vmatpush1.bf16.msra.mxu0 0
    %1332 = vmatprep.subr.bf16.mxu0 0
    %1333 = vmatpush1.bf16.msra.mxu0 0
    %1334 = vmatprep.subr.bf16.mxu0 0
    %1335 = vmatpush1.bf16.msra.mxu0 0
    %1336 = vmatprep.mubr.bf16.mxu0 0
    %1337 = vmatmul.mubr.bf16.gmra.mrb[0].mxu0 %v1220
    %v1338 = vpop.f32.mrb[0].mxu0
    %v1339 = vadd.f32 %v1255, %v1338
    %v1340 = vpop.f32.mrb[0].mxu0
    %v1341 = vpop.f32.mrb[0].mxu0
    %v1342 = vadd.f32 %v1255, %v1341
    %v1343 = vpop.f32.mrb[0].mxu0
    %1344 = vmatprep.mubr.bf16.mxu0 0
    %1345 = vmatmul.mubr.bf16.gmra.mrb[0].mxu0 %v1221
    %v1346 = vpop.f32.mrb[0].mxu0
    %v1347 = vadd.f32 %v1255, %v1346
    %v1348 = vpop.f32.mrb[0].mxu0
    %v1349 = vpop.f32.mrb[0].mxu0
    %v1350 = vadd.f32 %v1255, %v1349
    %v1351 = vpop.f32.mrb[0].mxu0
    %1352 = vmatprep.mubr.bf16.mxu0 0
    %1353 = vmatmul.mubr.bf16.gmra.mrb[0].mxu0 %v1222
    %v1354 = vpop.f32.mrb[0].mxu0
    %v1355 = vadd.f32 %v1255, %v1354
    %v1356 = vpop.f32.mrb[0].mxu0
    %v1357 = vpop.f32.mrb[0].mxu0
    %v1358 = vadd.f32 %v1255, %v1357
    %v1359 = vpop.f32.mrb[0].mxu0
    %1360 = vmatprep.mubr.bf16.mxu0 0
    %1361 = vmatmul.mubr.bf16.gmra.mrb[0].mxu0 %v1223
    %v1362 = vpop.f32.mrb[0].mxu0
    %v1363 = vadd.f32 %v1255, %v1362
    %v1364 = vpop.f32.mrb[0].mxu0
    %v1365 = vpop.f32.mrb[0].mxu0
    %v1366 = vadd.f32 %v1255, %v1365
    %v1367 = vpop.f32.mrb[0].mxu0
    %1368 = vmatprep.mubr.bf16.mxu0 0
    %1369 = vmatmul.mubr.bf16.gmra.mrb[0].mxu0 %v1224
    %v1370 = vpop.f32.mrb[0].mxu0
    %v1371 = vadd.f32 %v1255, %v1370
    %v1372 = vpop.f32.mrb[0].mxu0
    %v1373 = vpop.f32.mrb[0].mxu0
    %v1374 = vadd.f32 %v1255, %v1373
    %v1375 = vpop.f32.mrb[0].mxu0
    %1376 = vmatprep.mubr.bf16.mxu0 0
    %1377 = vmatmul.mubr.bf16.gmra.mrb[0].mxu0 %v1225
    %v1378 = vpop.f32.mrb[0].mxu0
    %v1379 = vadd.f32 %v1255, %v1378
    %v1380 = vpop.f32.mrb[0].mxu0
    %v1381 = vpop.f32.mrb[0].mxu0
    %v1382 = vadd.f32 %v1255, %v1381
    %v1383 = vpop.f32.mrb[0].mxu0
    %1384 = vmatprep.mubr.bf16.mxu0 0
    %1385 = vmatmul.mubr.bf16.gmra.mrb[0].mxu0 %v1226
    %v1386 = vpop.f32.mrb[0].mxu0
    %v1387 = vadd.f32 %v1255, %v1386
    %v1388 = vpop.f32.mrb[0].mxu0
    %v1389 = vpop.f32.mrb[0].mxu0
    %v1390 = vadd.f32 %v1255, %v1389
    %v1391 = vpop.f32.mrb[0].mxu0
    %1392 = vmatprep.mubr.bf16.mxu0 0
    %1393 = vmatmul.mubr.bf16.gmra.mrb[0].mxu0 %v1227
    %v1394 = vpop.f32.mrb[0].mxu0
    %v1395 = vadd.f32 %v1255, %v1394
    %v1396 = vpop.f32.mrb[0].mxu0
    %v1397 = vpop.f32.mrb[0].mxu0
    %v1398 = vadd.f32 %v1255, %v1397
    %v1399 = vpop.f32.mrb[0].mxu0
    %1400 = vmatprep.mubr.bf16.mxu0 0
    %1401 = vmatmul.mubr.bf16.gmra.mrb[0].mxu0 %v1228
    %v1402 = vpop.f32.mrb[0].mxu0
    %v1403 = vadd.f32 %v1255, %v1402
    %v1404 = vpop.f32.mrb[0].mxu0
    %v1405 = vpop.f32.mrb[0].mxu0
    %v1406 = vadd.f32 %v1255, %v1405
    %v1407 = vpop.f32.mrb[0].mxu0
    %1408 = vmatprep.mubr.bf16.mxu0 0
    %1409 = vmatmul.mubr.bf16.gmra.mrb[0].mxu0 %v1229
    %v1410 = vpop.f32.mrb[0].mxu0
    %v1411 = vadd.f32 %v1255, %v1410
    %v1412 = vpop.f32.mrb[0].mxu0
    %v1413 = vpop.f32.mrb[0].mxu0
    %v1414 = vadd.f32 %v1255, %v1413
    %v1415 = vpop.f32.mrb[0].mxu0
    %1416 = vmatprep.mubr.bf16.mxu0 0
    %1417 = vmatmul.mubr.bf16.gmra.mrb[0].mxu0 %v1230
    %v1418 = vpop.f32.mrb[0].mxu0
    %v1419 = vadd.f32 %v1255, %v1418
    %v1420 = vpop.f32.mrb[0].mxu0
    %v1421 = vpop.f32.mrb[0].mxu0
    %v1422 = vadd.f32 %v1255, %v1421
    %v1423 = vpop.f32.mrb[0].mxu0
    %1424 = vmatprep.mubr.bf16.mxu0 0
    %1425 = vmatmul.mubr.bf16.gmra.mrb[0].mxu0 %v1231
    %v1426 = vpop.f32.mrb[0].mxu0
    %v1427 = vadd.f32 %v1255, %v1426
    %v1428 = vpop.f32.mrb[0].mxu0
    %v1429 = vpop.f32.mrb[0].mxu0
    %v1430 = vadd.f32 %v1255, %v1429
    %v1431 = vpop.f32.mrb[0].mxu0
    %1432 = vmatprep.mubr.bf16.mxu0 0
    %1433 = vmatmul.mubr.bf16.gmra.mrb[0].mxu0 %v1232
    %v1434 = vpop.f32.mrb[0].mxu0
    %v1435 = vadd.f32 %v1255, %v1434
    %v1436 = vpop.f32.mrb[0].mxu0
    %v1437 = vpop.f32.mrb[0].mxu0
    %v1438 = vadd.f32 %v1255, %v1437
    %v1439 = vpop.f32.mrb[0].mxu0
    %1440 = vmatprep.mubr.bf16.mxu0 0
    %1441 = vmatmul.mubr.bf16.gmra.mrb[0].mxu0 %v1233
    %v1442 = vpop.f32.mrb[0].mxu0
    %v1443 = vadd.f32 %v1255, %v1442
    %v1444 = vpop.f32.mrb[0].mxu0
    %v1445 = vpop.f32.mrb[0].mxu0
    %v1446 = vadd.f32 %v1255, %v1445
    %v1447 = vpop.f32.mrb[0].mxu0
    %1448 = vmatprep.mubr.bf16.mxu0 0
    %1449 = vmatmul.mubr.bf16.gmra.mrb[0].mxu0 %v1234
    %v1450 = vpop.f32.mrb[0].mxu0
    %v1451 = vadd.f32 %v1255, %v1450
    %v1452 = vpop.f32.mrb[0].mxu0
    %v1453 = vpop.f32.mrb[0].mxu0
    %v1454 = vadd.f32 %v1255, %v1453
    %v1455 = vpop.f32.mrb[0].mxu0
    %1456 = vmatprep.mubr.bf16.mxu0 0
    %1457 = vmatmul.mubr.bf16.gmra.mrb[0].mxu0 %v1235
    %v1458 = vpop.f32.mrb[0].mxu0
    %v1459 = vadd.f32 %v1255, %v1458
    %v1460 = vpop.f32.mrb[0].mxu0
    %v1461 = vpop.f32.mrb[0].mxu0
    %v1462 = vadd.f32 %v1255, %v1461
    %v1463 = vpop.f32.mrb[0].mxu0
    %1464 = vdwg.mxu0
    %1465 = vst [vmem:[#allocation2] sm:$0xff] %v1339
    %1466 = vst [vmem:[#allocation2 + $0x8] sm:$0xff] %v1342
    %1467 = vst [vmem:[#allocation2 + $0x10] sm:$0xff] %v1347
    %1468 = vst [vmem:[#allocation2 + $0x18] sm:$0xff] %v1350
    %1469 = vst [vmem:[#allocation2 + $0x20] sm:$0xff] %v1355
    %1470 = vst [vmem:[#allocation2 + $0x28] sm:$0xff] %v1358
    %1471 = vst [vmem:[#allocation2 + $0x30] sm:$0xff] %v1363
    %1472 = vst [vmem:[#allocation2 + $0x38] sm:$0xff] %v1366
    %1473 = vst [vmem:[#allocation2 + $0x40] sm:$0xff] %v1371
    %1474 = vst [vmem:[#allocation2 + $0x48] sm:$0xff] %v1374
    %1475 = vst [vmem:[#allocation2 + $0x50] sm:$0xff] %v1379
    %1476 = vst [vmem:[#allocation2 + $0x58] sm:$0xff] %v1382
    %1477 = vst [vmem:[#allocation2 + $0x60] sm:$0xff] %v1387
    %1478 = vst [vmem:[#allocation2 + $0x68] sm:$0xff] %v1390
    %1479 = vst [vmem:[#allocation2 + $0x70] sm:$0xff] %v1395
    %1480 = vst [vmem:[#allocation2 + $0x78] sm:$0xff] %v1398
    %1481 = vst [vmem:[#allocation2 + $0x80] sm:$0xff] %v1403
    %1482 = vst [vmem:[#allocation2 + $0x88] sm:$0xff] %v1406
    %1483 = vst [vmem:[#allocation2 + $0x90] sm:$0xff] %v1411
    %1484 = vst [vmem:[#allocation2 + $0x98] sm:$0xff] %v1414
    %1485 = vst [vmem:[#allocation2 + $0xa0] sm:$0xff] %v1419
    %1486 = vst [vmem:[#allocation2 + $0xa8] sm:$0xff] %v1422
    %1487 = vst [vmem:[#allocation2 + $0xb0] sm:$0xff] %v1427
    %1488 = vst [vmem:[#allocation2 + $0xb8] sm:$0xff] %v1430
    %1489 = vst [vmem:[#allocation2 + $0xc0] sm:$0xff] %v1435
    %1490 = vst [vmem:[#allocation2 + $0xc8] sm:$0xff] %v1438
    %1491 = vst [vmem:[#allocation2 + $0xd0] sm:$0xff] %v1443
    %1492 = vst [vmem:[#allocation2 + $0xd8] sm:$0xff] %v1446
    %1493 = vst [vmem:[#allocation2 + $0xe0] sm:$0xff] %v1451
    %1494 = vst [vmem:[#allocation2 + $0xe8] sm:$0xff] %v1454
    %1495 = vst [vmem:[#allocation2 + $0xf0] sm:$0xff] %v1459
    %1496 = vst [vmem:[#allocation2 + $0xf8] sm:$0xff] %v1462
    // Predicated region
    $region22: #{_forward_padded.1} parent=1 // pred_check
      _
    $region23: #{_forward_padded.1} parent=1 // pred_check_branch
      %1498 = sbr.rel (0) target = $region25
    $region24: #{_forward_padded.1} parent=1 // pred_region
      %s1500 = ssub.s32 4096, 4096
      %1501 = vsyncadd [#allocation3], %s1500
      %s1502 = sshll.u32 [#allocation2], 4
      %s1503 = int_to_ptr.vmem [resolvable:$true] %s1502
      %1508 = dma.vmem_to_hbm [thread:$0]  %s1503, 4096, %s5, [#allocation3], 128, 128, 8
    $region25: #{_forward_padded.1} parent=1 // pred_fallthru
      _
    // Predicated region
    $region26: #{_forward_padded.1} parent=1 // pred_check
      _
    $region27: #{_forward_padded.1} parent=1 // pred_check_branch
      %1510 = sbr.rel (0) target = $region29
    $region28: #{_forward_padded.1} parent=1 // pred_region
      %1511 = dma.done [#allocation3], 4096
    $region29: #{_forward_padded.1} parent=1 // pred_fallthru
      _
    %1512 = vsyncpa [#allocation3], 1

</llo_original>
